<compile_context>
chip_gen: v5e
topology: v5e:2x2
jax: 0.10.0
libtpu: 0.0.40
codegen_flags: <defaults>
</compile_context>

<pallas_src>
import functools

import jax
import jax.numpy as jnp
from jax.experimental import pallas as pl
from jax.experimental.pallas import tpu as pltpu


def _residual_block_kernel(x_ref, w1_ref, w2_ref, gb_ref, o_ref, *, N, C, H, W):
    NC, HW = x_ref.shape                 # (N*C, H*W): row = n*C + c, lane = h*W + w
    eps = 1e-5
    inv_cnt = 1.0 / (N * H * W)

    x = x_ref[...]                       # (N*C, H*W) f32, lane-dense
    gamma = gb_ref[:, 0:1]               # (N*C, 1), tiled over n in the wrapper
    beta = gb_ref[:, 1:2]

    # ---- border masks: hoisted once, shape (1, H*W), shared by both convs ----
    # Row-local lane index p = h*W + w (W is a power of two -> bit twiddling).
    pos = jax.lax.broadcasted_iota(jnp.int32, (1, HW), 1)
    w_bits = (W - 1).bit_length()
    w_idx = pos & (W - 1)
    h_idx = pos >> w_bits
    w_lo, w_hi = w_idx > 0, w_idx < (W - 1)
    h_lo, h_hi = h_idx > 0, h_idx < (H - 1)

    offsets = tuple((dy, dx) for dy in (-1, 0, 1) for dx in (-1, 0, 1))
    tap_masks = []
    for dy, dx in offsets:
        m = None
        if dx == -1:
            m = w_lo
        elif dx == 1:
            m = w_hi
        if dy == -1:
            m = h_lo if m is None else m & h_lo
        elif dy == 1:
            m = h_hi if m is None else m & h_hi
        tap_masks.append(m)

    def conv3x3(a, wb):
        # 3x3 "SAME" conv on the MXU.  shifted[p] = a[p + dy*W + dx]; the lane
        # roll is cyclic within each (n, c) row of H*W lanes, and every wrapped
        # position is zeroed by the h/w border masks.  NOTE: this masking is
        # complete only because |dy|,|dx| <= 1 and H, W >= 2 (any wrap must
        # cross an h or w border) -- asserted in the wrapper.
        taps = []
        for (dy, dx), m in zip(offsets, tap_masks):
            s = dy * W + dx
            src = a if s == 0 else pltpu.roll(a, shift=(-s) % HW, axis=1)
            if m is not None:
                src = jnp.where(m, src, 0.0)
            taps.append(src)                       # (N*C, H*W)
        im2col = jnp.concatenate(taps, axis=0)     # (9*N*C, H*W)
        return jnp.dot(wb, im2col,                 # (N*C, H*W) on the MXU
                       preferred_element_type=jnp.float32,
                       precision=jax.lax.Precision.HIGHEST)

    def batchnorm(y, relu):
        # Training-mode BatchNorm2d: per-channel stats over (n, h, w), biased
        # variance, shared gamma/beta.  Lane-reduce per row, then sum the N
        # rows of each channel with cheap XLU sublane rotations.
        row_sum = jnp.sum(y, axis=1, keepdims=True)        # (N*C, 1)
        tot = row_sum
        for k in range(1, N):
            tot = tot + pltpu.roll(row_sum, shift=k * C, axis=0)
        mean = tot * inv_cnt
        yc = y - mean                                      # centered (two-pass var)
        sq_sum = jnp.sum(yc * yc, axis=1, keepdims=True)   # (N*C, 1)
        tot2 = sq_sum
        for k in range(1, N):
            tot2 = tot2 + pltpu.roll(sq_sum, shift=k * C, axis=0)
        var = tot2 * inv_cnt
        scale = gamma * jax.lax.rsqrt(var + eps)
        out = yc * scale + beta
        return jnp.maximum(out, 0.0) if relu else out

    h1 = batchnorm(conv3x3(x, w1_ref[...]), relu=True)     # conv1 -> bn -> relu
    h2 = batchnorm(conv3x3(h1, w2_ref[...]), relu=False)   # conv2 -> bn (shared gamma/beta)
    o_ref[...] = jnp.maximum(h2 + x, 0.0).astype(o_ref.dtype)   # residual + relu


def residual_block(x_nchw, w1_oihw, b1, w2_oihw, b2, gamma, beta):
    """x: (N, C, H, W).  w*: (Cout, Cin, 3, 3) like nn.Conv2d.  b*/gamma/beta: (C,).

    Conv biases are accepted for interface parity but not used inside the
    kernel: training-mode BatchNorm subtracts the per-channel batch mean
    immediately after each conv, so a per-channel constant bias cancels
    exactly (only last-ulp rounding differences vs. the PyTorch module).
    """
    del b1, b2
    N, C, H, W = x_nchw.shape
    NC, HW = N * C, H * W
    assert W & (W - 1) == 0 and W >= 2 and H >= 2, (
        "kernel assumes power-of-two W (bit-twiddled h/w split) and H, W >= 2 "
        "(border masks neutralize roll wraparound only for the 3x3 stencil)")

    # NCHW -> (N*C, H*W) is a pure reshape (no transpose / relayout dispatch).
    x2d = x_nchw.reshape(NC, HW).astype(jnp.float32)

    def block_weight(w_oihw):
        # Build (N*C, 9*N*C): columns ordered (tap, n*C + ci), rows n*C + co.
        # Each per-tap block is block-diagonal over the batch, so a single MXU
        # matmul against the concatenated im2col handles all N images at once.
        w_tap = jnp.transpose(w_oihw, (2, 3, 0, 1)).reshape(9, C, C).astype(jnp.float32)
        eye_n = jnp.eye(N, dtype=jnp.float32)
        blocks = jax.vmap(lambda wt: jnp.kron(eye_n, wt))(w_tap)     # (9, N*C, N*C)
        return jnp.transpose(blocks, (1, 0, 2)).reshape(NC, 9 * NC)

    wb1 = block_weight(w1_oihw)
    wb2 = block_weight(w2_oihw)
    # gamma/beta tiled per image so row n*C + c carries channel c's parameters.
    gb = jnp.stack([jnp.tile(gamma.reshape(-1), N),
                    jnp.tile(beta.reshape(-1), N)], axis=1).astype(jnp.float32)

    vmem = pl.BlockSpec(memory_space=pltpu.MemorySpace.VMEM)
    kernel = functools.partial(_residual_block_kernel, N=N, C=C, H=H, W=W)
    out2d = pl.pallas_call(
        kernel,
        out_shape=jax.ShapeDtypeStruct((NC, HW), jnp.float32),
        in_specs=[vmem, vmem, vmem, vmem],
        out_specs=vmem,
        cost_estimate=pl.CostEstimate(
            flops=2 * 2 * NC * (9 * NC) * HW,
            transcendentals=2 * NC,
            bytes_accessed=(2 * NC * HW + 2 * NC * 9 * NC + 2 * NC) * 4,
        ),
    )(x2d, wb1, wb2, gb)

    return out2d.reshape(N, C, H, W).astype(x_nchw.dtype)


def reference_forward(x_nchw, w1_oihw, b1, w2_oihw, b2, gamma, beta):
    """Pure-JAX NCHW reference with the same semantics as the PyTorch module."""
    def conv(inp, w, b):
        out = jax.lax.conv_general_dilated(
            inp, w, window_strides=(1, 1), padding="SAME",
            dimension_numbers=("NCHW", "OIHW", "NCHW"))
        return out + b.reshape(1, -1, 1, 1)

    def bn(a):
        mean = a.mean(axis=(0, 2, 3), keepdims=True)
        var = ((a - mean) ** 2).mean(axis=(0, 2, 3), keepdims=True)
        return ((a - mean) * jax.lax.rsqrt(var + 1e-5)
                * gamma.reshape(1, -1, 1, 1) + beta.reshape(1, -1, 1, 1))

    h = jnp.maximum(bn(conv(x_nchw, w1_oihw, b1)), 0.0)
    h = bn(conv(h, w2_oihw, b2))
    return jnp.maximum(h + x_nchw, 0.0)


if __name__ == "__main__":
    N, C, H, W = 2, 4, 16, 16      # PyTorch input (2, 4, 16, 16)

    key = jax.random.PRNGKey(0)
    k_x, k_w1, k_b1, k_w2, k_b2 = jax.random.split(key, 5)

    x = jax.random.normal(k_x, (N, C, H, W), dtype=jnp.float32)

    # Conv weights in OIHW layout like nn.Conv2d; BatchNorm fresh init.
    fan_in = C * 3 * 3
    bound = 1.0 / (fan_in ** 0.5)
    w1 = jax.random.uniform(k_w1, (C, C, 3, 3), jnp.float32, -bound, bound)
    b1 = jax.random.uniform(k_b1, (C,), jnp.float32, -bound, bound)
    w2 = jax.random.uniform(k_w2, (C, C, 3, 3), jnp.float32, -bound, bound)
    b2 = jax.random.uniform(k_b2, (C,), jnp.float32, -bound, bound)
    gamma = jnp.ones((C,), jnp.float32)
    beta = jnp.zeros((C,), jnp.float32)

    out = residual_block(x, w1, b1, w2, b2, gamma, beta)
    out = jax.block_until_ready(out)

    ref = reference_forward(x, w1, b1, w2, b2, gamma, beta)
    assert out.shape == (N, C, H, W)
    assert jnp.allclose(out, ref, atol=2e-3, rtol=2e-3), "mismatch vs JAX reference"

    print("KERNEL_OK")
</pallas_src>

<mosaic_0001>
module attributes {stable_mosaic.version = 11 : i64} {
  func.func @_residual_block_kernel(%arg0: memref<8x256xf32, #tpu.memory_space<vmem>>, %arg1: memref<8x72xf32, #tpu.memory_space<vmem>>, %arg2: memref<8x72xf32, #tpu.memory_space<vmem>>, %arg3: memref<8x2xf32, #tpu.memory_space<vmem>>, %arg4: memref<8x256xf32, #tpu.memory_space<vmem>>) attributes {dimension_semantics = [], scalar_prefetch = 0 : i64, scratch_operands = 0 : i64, tpu.core_type = #tpu.core_type<tc>} {
    %c0 = arith.constant 0 : index
    %c0_0 = arith.constant 0 : index
    %0 = vector.load %arg0[%c0, %c0_0] : memref<8x256xf32, #tpu.memory_space<vmem>>, vector<8x256xf32>
    %c0_1 = arith.constant 0 : index
    %c0_2 = arith.constant 0 : index
    %1 = vector.load %arg3[%c0_1, %c0_2] : memref<8x2xf32, #tpu.memory_space<vmem>>, vector<8x1xf32>
    %c0_3 = arith.constant 0 : index
    %c1 = arith.constant 1 : index
    %2 = vector.load %arg3[%c0_3, %c1] : memref<8x2xf32, #tpu.memory_space<vmem>>, vector<8x1xf32>
    %3 = tpu.iota {dimensions = array<i32: 1>} : vector<1x256xi32>
    %c15_i32 = arith.constant 15 : i32
    %4 = vector.broadcast %c15_i32 : i32 to vector<1x256xi32>
    %5 = arith.andi %3, %4 : vector<1x256xi32>
    %c4_i32 = arith.constant 4 : i32
    %6 = vector.broadcast %c4_i32 : i32 to vector<1x256xi32>
    %7 = arith.shrsi %3, %6 : vector<1x256xi32>
    %c0_i32 = arith.constant 0 : i32
    %8 = vector.broadcast %c0_i32 : i32 to vector<1x256xi32>
    %9 = arith.cmpi sgt, %5, %8 : vector<1x256xi32>
    %c15_i32_4 = arith.constant 15 : i32
    %10 = vector.broadcast %c15_i32_4 : i32 to vector<1x256xi32>
    %11 = arith.cmpi slt, %5, %10 : vector<1x256xi32>
    %c0_i32_5 = arith.constant 0 : i32
    %12 = vector.broadcast %c0_i32_5 : i32 to vector<1x256xi32>
    %13 = arith.cmpi sgt, %7, %12 : vector<1x256xi32>
    %c15_i32_6 = arith.constant 15 : i32
    %14 = vector.broadcast %c15_i32_6 : i32 to vector<1x256xi32>
    %15 = arith.cmpi slt, %7, %14 : vector<1x256xi32>
    %16 = arith.andi %9, %13 : vector<1x256xi1>
    %17 = arith.andi %11, %13 : vector<1x256xi1>
    %18 = arith.andi %9, %15 : vector<1x256xi1>
    %19 = arith.andi %11, %15 : vector<1x256xi1>
    %c0_7 = arith.constant 0 : index
    %c0_8 = arith.constant 0 : index
    %20 = vector.load %arg1[%c0_7, %c0_8] : memref<8x72xf32, #tpu.memory_space<vmem>>, vector<8x72xf32>
    %c17_i32 = arith.constant 17 : i32
    %21 = tpu.dynamic_rotate %0 by %c17_i32 dim 1 : vector<8x256xf32>, i32 -> vector<8x256xf32>
    %cst = arith.constant 0.000000e+00 : f32
    %22 = vector.shape_cast %16 : vector<1x256xi1> to vector<1x256xi1>
    %23 = vector.broadcast %22 : vector<1x256xi1> to vector<8x256xi1>
    %24 = vector.broadcast %cst : f32 to vector<8x256xf32>
    %25 = arith.select %23, %21, %24 : vector<8x256xi1>, vector<8x256xf32>
    %c16_i32 = arith.constant 16 : i32
    %26 = tpu.dynamic_rotate %0 by %c16_i32 dim 1 : vector<8x256xf32>, i32 -> vector<8x256xf32>
    %cst_9 = arith.constant 0.000000e+00 : f32
    %27 = vector.shape_cast %13 : vector<1x256xi1> to vector<1x256xi1>
    %28 = vector.broadcast %27 : vector<1x256xi1> to vector<8x256xi1>
    %29 = vector.broadcast %cst_9 : f32 to vector<8x256xf32>
    %30 = arith.select %28, %26, %29 : vector<8x256xi1>, vector<8x256xf32>
    %c15_i32_10 = arith.constant 15 : i32
    %31 = tpu.dynamic_rotate %0 by %c15_i32_10 dim 1 : vector<8x256xf32>, i32 -> vector<8x256xf32>
    %cst_11 = arith.constant 0.000000e+00 : f32
    %32 = vector.shape_cast %17 : vector<1x256xi1> to vector<1x256xi1>
    %33 = vector.broadcast %32 : vector<1x256xi1> to vector<8x256xi1>
    %34 = vector.broadcast %cst_11 : f32 to vector<8x256xf32>
    %35 = arith.select %33, %31, %34 : vector<8x256xi1>, vector<8x256xf32>
    %c1_i32 = arith.constant 1 : i32
    %36 = tpu.dynamic_rotate %0 by %c1_i32 dim 1 : vector<8x256xf32>, i32 -> vector<8x256xf32>
    %cst_12 = arith.constant 0.000000e+00 : f32
    %37 = vector.shape_cast %9 : vector<1x256xi1> to vector<1x256xi1>
    %38 = vector.broadcast %37 : vector<1x256xi1> to vector<8x256xi1>
    %39 = vector.broadcast %cst_12 : f32 to vector<8x256xf32>
    %40 = arith.select %38, %36, %39 : vector<8x256xi1>, vector<8x256xf32>
    %c255_i32 = arith.constant 255 : i32
    %41 = tpu.dynamic_rotate %0 by %c255_i32 dim 1 : vector<8x256xf32>, i32 -> vector<8x256xf32>
    %cst_13 = arith.constant 0.000000e+00 : f32
    %42 = vector.shape_cast %11 : vector<1x256xi1> to vector<1x256xi1>
    %43 = vector.broadcast %42 : vector<1x256xi1> to vector<8x256xi1>
    %44 = vector.broadcast %cst_13 : f32 to vector<8x256xf32>
    %45 = arith.select %43, %41, %44 : vector<8x256xi1>, vector<8x256xf32>
    %c241_i32 = arith.constant 241 : i32
    %46 = tpu.dynamic_rotate %0 by %c241_i32 dim 1 : vector<8x256xf32>, i32 -> vector<8x256xf32>
    %cst_14 = arith.constant 0.000000e+00 : f32
    %47 = vector.shape_cast %18 : vector<1x256xi1> to vector<1x256xi1>
    %48 = vector.broadcast %47 : vector<1x256xi1> to vector<8x256xi1>
    %49 = vector.broadcast %cst_14 : f32 to vector<8x256xf32>
    %50 = arith.select %48, %46, %49 : vector<8x256xi1>, vector<8x256xf32>
    %c240_i32 = arith.constant 240 : i32
    %51 = tpu.dynamic_rotate %0 by %c240_i32 dim 1 : vector<8x256xf32>, i32 -> vector<8x256xf32>
    %cst_15 = arith.constant 0.000000e+00 : f32
    %52 = vector.shape_cast %15 : vector<1x256xi1> to vector<1x256xi1>
    %53 = vector.broadcast %52 : vector<1x256xi1> to vector<8x256xi1>
    %54 = vector.broadcast %cst_15 : f32 to vector<8x256xf32>
    %55 = arith.select %53, %51, %54 : vector<8x256xi1>, vector<8x256xf32>
    %c239_i32 = arith.constant 239 : i32
    %56 = tpu.dynamic_rotate %0 by %c239_i32 dim 1 : vector<8x256xf32>, i32 -> vector<8x256xf32>
    %cst_16 = arith.constant 0.000000e+00 : f32
    %57 = vector.shape_cast %19 : vector<1x256xi1> to vector<1x256xi1>
    %58 = vector.broadcast %57 : vector<1x256xi1> to vector<8x256xi1>
    %59 = vector.broadcast %cst_16 : f32 to vector<8x256xf32>
    %60 = arith.select %58, %56, %59 : vector<8x256xi1>, vector<8x256xf32>
    %61 = tpu.concatenate %25, %30, %35, %40, %0, %45, %50, %55, %60 in 0 : vector<8x256xf32>, vector<8x256xf32>, vector<8x256xf32>, vector<8x256xf32>, vector<8x256xf32>, vector<8x256xf32>, vector<8x256xf32>, vector<8x256xf32>, vector<8x256xf32> -> vector<72x256xf32>
    %cst_17 = arith.constant dense<0.000000e+00> : vector<8x256xf32>
    %62 = tpu.matmul %20, %61, %cst_17 {dimension_numbers = #tpu.dot_dimension_numbers<[1], [0], [0], [1], [0, 0, 1, 1], [], []>, precision = #tpu.contract_precision<fp32>} : vector<8x72xf32>, vector<72x256xf32>, vector<8x256xf32> -> vector<8x256xf32>
    %cst_18 = arith.constant dense<0.000000e+00> : vector<8xf32>
    %63 = vector.multi_reduction <add>, %62, %cst_18 [1] : vector<8x256xf32> to vector<8xf32>
    %64 = vector.shape_cast %63 : vector<8xf32> to vector<8x1xf32>
    %c4_i32_19 = arith.constant 4 : i32
    %65 = tpu.dynamic_rotate %64 by %c4_i32_19 dim 0 : vector<8x1xf32>, i32 -> vector<8x1xf32>
    %66 = arith.addf %64, %65 : vector<8x1xf32>
    %cst_20 = arith.constant 0.001953125 : f32
    %67 = vector.broadcast %cst_20 : f32 to vector<8x1xf32>
    %68 = arith.mulf %66, %67 : vector<8x1xf32>
    %69 = vector.broadcast %68 : vector<8x1xf32> to vector<8x256xf32>
    %70 = arith.subf %62, %69 : vector<8x256xf32>
    %71 = arith.mulf %70, %70 : vector<8x256xf32>
    %cst_21 = arith.constant dense<0.000000e+00> : vector<8xf32>
    %72 = vector.multi_reduction <add>, %71, %cst_21 [1] : vector<8x256xf32> to vector<8xf32>
    %73 = vector.shape_cast %72 : vector<8xf32> to vector<8x1xf32>
    %c4_i32_22 = arith.constant 4 : i32
    %74 = tpu.dynamic_rotate %73 by %c4_i32_22 dim 0 : vector<8x1xf32>, i32 -> vector<8x1xf32>
    %75 = arith.addf %73, %74 : vector<8x1xf32>
    %cst_23 = arith.constant 0.001953125 : f32
    %76 = vector.broadcast %cst_23 : f32 to vector<8x1xf32>
    %77 = arith.mulf %75, %76 : vector<8x1xf32>
    %cst_24 = arith.constant 9.99999974E-6 : f32
    %78 = vector.broadcast %cst_24 : f32 to vector<8x1xf32>
    %79 = arith.addf %77, %78 : vector<8x1xf32>
    %80 = math.rsqrt %79 : vector<8x1xf32>
    %81 = arith.mulf %1, %80 : vector<8x1xf32>
    %82 = vector.broadcast %81 : vector<8x1xf32> to vector<8x256xf32>
    %83 = arith.mulf %70, %82 : vector<8x256xf32>
    %84 = vector.broadcast %2 : vector<8x1xf32> to vector<8x256xf32>
    %85 = arith.addf %83, %84 : vector<8x256xf32>
    %cst_25 = arith.constant 0.000000e+00 : f32
    %86 = vector.broadcast %cst_25 : f32 to vector<8x256xf32>
    %87 = arith.maximumf %85, %86 : vector<8x256xf32>
    %c0_26 = arith.constant 0 : index
    %c0_27 = arith.constant 0 : index
    %88 = vector.load %arg2[%c0_26, %c0_27] : memref<8x72xf32, #tpu.memory_space<vmem>>, vector<8x72xf32>
    %c17_i32_28 = arith.constant 17 : i32
    %89 = tpu.dynamic_rotate %87 by %c17_i32_28 dim 1 : vector<8x256xf32>, i32 -> vector<8x256xf32>
    %cst_29 = arith.constant 0.000000e+00 : f32
    %90 = vector.shape_cast %16 : vector<1x256xi1> to vector<1x256xi1>
    %91 = vector.broadcast %90 : vector<1x256xi1> to vector<8x256xi1>
    %92 = vector.broadcast %cst_29 : f32 to vector<8x256xf32>
    %93 = arith.select %91, %89, %92 : vector<8x256xi1>, vector<8x256xf32>
    %c16_i32_30 = arith.constant 16 : i32
    %94 = tpu.dynamic_rotate %87 by %c16_i32_30 dim 1 : vector<8x256xf32>, i32 -> vector<8x256xf32>
    %cst_31 = arith.constant 0.000000e+00 : f32
    %95 = vector.shape_cast %13 : vector<1x256xi1> to vector<1x256xi1>
    %96 = vector.broadcast %95 : vector<1x256xi1> to vector<8x256xi1>
    %97 = vector.broadcast %cst_31 : f32 to vector<8x256xf32>
    %98 = arith.select %96, %94, %97 : vector<8x256xi1>, vector<8x256xf32>
    %c15_i32_32 = arith.constant 15 : i32
    %99 = tpu.dynamic_rotate %87 by %c15_i32_32 dim 1 : vector<8x256xf32>, i32 -> vector<8x256xf32>
    %cst_33 = arith.constant 0.000000e+00 : f32
    %100 = vector.shape_cast %17 : vector<1x256xi1> to vector<1x256xi1>
    %101 = vector.broadcast %100 : vector<1x256xi1> to vector<8x256xi1>
    %102 = vector.broadcast %cst_33 : f32 to vector<8x256xf32>
    %103 = arith.select %101, %99, %102 : vector<8x256xi1>, vector<8x256xf32>
    %c1_i32_34 = arith.constant 1 : i32
    %104 = tpu.dynamic_rotate %87 by %c1_i32_34 dim 1 : vector<8x256xf32>, i32 -> vector<8x256xf32>
    %cst_35 = arith.constant 0.000000e+00 : f32
    %105 = vector.shape_cast %9 : vector<1x256xi1> to vector<1x256xi1>
    %106 = vector.broadcast %105 : vector<1x256xi1> to vector<8x256xi1>
    %107 = vector.broadcast %cst_35 : f32 to vector<8x256xf32>
    %108 = arith.select %106, %104, %107 : vector<8x256xi1>, vector<8x256xf32>
    %c255_i32_36 = arith.constant 255 : i32
    %109 = tpu.dynamic_rotate %87 by %c255_i32_36 dim 1 : vector<8x256xf32>, i32 -> vector<8x256xf32>
    %cst_37 = arith.constant 0.000000e+00 : f32
    %110 = vector.shape_cast %11 : vector<1x256xi1> to vector<1x256xi1>
    %111 = vector.broadcast %110 : vector<1x256xi1> to vector<8x256xi1>
    %112 = vector.broadcast %cst_37 : f32 to vector<8x256xf32>
    %113 = arith.select %111, %109, %112 : vector<8x256xi1>, vector<8x256xf32>
    %c241_i32_38 = arith.constant 241 : i32
    %114 = tpu.dynamic_rotate %87 by %c241_i32_38 dim 1 : vector<8x256xf32>, i32 -> vector<8x256xf32>
    %cst_39 = arith.constant 0.000000e+00 : f32
    %115 = vector.shape_cast %18 : vector<1x256xi1> to vector<1x256xi1>
    %116 = vector.broadcast %115 : vector<1x256xi1> to vector<8x256xi1>
    %117 = vector.broadcast %cst_39 : f32 to vector<8x256xf32>
    %118 = arith.select %116, %114, %117 : vector<8x256xi1>, vector<8x256xf32>
    %c240_i32_40 = arith.constant 240 : i32
    %119 = tpu.dynamic_rotate %87 by %c240_i32_40 dim 1 : vector<8x256xf32>, i32 -> vector<8x256xf32>
    %cst_41 = arith.constant 0.000000e+00 : f32
    %120 = vector.shape_cast %15 : vector<1x256xi1> to vector<1x256xi1>
    %121 = vector.broadcast %120 : vector<1x256xi1> to vector<8x256xi1>
    %122 = vector.broadcast %cst_41 : f32 to vector<8x256xf32>
    %123 = arith.select %121, %119, %122 : vector<8x256xi1>, vector<8x256xf32>
    %c239_i32_42 = arith.constant 239 : i32
    %124 = tpu.dynamic_rotate %87 by %c239_i32_42 dim 1 : vector<8x256xf32>, i32 -> vector<8x256xf32>
    %cst_43 = arith.constant 0.000000e+00 : f32
    %125 = vector.shape_cast %19 : vector<1x256xi1> to vector<1x256xi1>
    %126 = vector.broadcast %125 : vector<1x256xi1> to vector<8x256xi1>
    %127 = vector.broadcast %cst_43 : f32 to vector<8x256xf32>
    %128 = arith.select %126, %124, %127 : vector<8x256xi1>, vector<8x256xf32>
    %129 = tpu.concatenate %93, %98, %103, %108, %87, %113, %118, %123, %128 in 0 : vector<8x256xf32>, vector<8x256xf32>, vector<8x256xf32>, vector<8x256xf32>, vector<8x256xf32>, vector<8x256xf32>, vector<8x256xf32>, vector<8x256xf32>, vector<8x256xf32> -> vector<72x256xf32>
    %cst_44 = arith.constant dense<0.000000e+00> : vector<8x256xf32>
    %130 = tpu.matmul %88, %129, %cst_44 {dimension_numbers = #tpu.dot_dimension_numbers<[1], [0], [0], [1], [0, 0, 1, 1], [], []>, precision = #tpu.contract_precision<fp32>} : vector<8x72xf32>, vector<72x256xf32>, vector<8x256xf32> -> vector<8x256xf32>
    %cst_45 = arith.constant dense<0.000000e+00> : vector<8xf32>
    %131 = vector.multi_reduction <add>, %130, %cst_45 [1] : vector<8x256xf32> to vector<8xf32>
    %132 = vector.shape_cast %131 : vector<8xf32> to vector<8x1xf32>
    %c4_i32_46 = arith.constant 4 : i32
    %133 = tpu.dynamic_rotate %132 by %c4_i32_46 dim 0 : vector<8x1xf32>, i32 -> vector<8x1xf32>
    %134 = arith.addf %132, %133 : vector<8x1xf32>
    %cst_47 = arith.constant 0.001953125 : f32
    %135 = vector.broadcast %cst_47 : f32 to vector<8x1xf32>
    %136 = arith.mulf %134, %135 : vector<8x1xf32>
    %137 = vector.broadcast %136 : vector<8x1xf32> to vector<8x256xf32>
    %138 = arith.subf %130, %137 : vector<8x256xf32>
    %139 = arith.mulf %138, %138 : vector<8x256xf32>
    %cst_48 = arith.constant dense<0.000000e+00> : vector<8xf32>
    %140 = vector.multi_reduction <add>, %139, %cst_48 [1] : vector<8x256xf32> to vector<8xf32>
    %141 = vector.shape_cast %140 : vector<8xf32> to vector<8x1xf32>
    %c4_i32_49 = arith.constant 4 : i32
    %142 = tpu.dynamic_rotate %141 by %c4_i32_49 dim 0 : vector<8x1xf32>, i32 -> vector<8x1xf32>
    %143 = arith.addf %141, %142 : vector<8x1xf32>
    %cst_50 = arith.constant 0.001953125 : f32
    %144 = vector.broadcast %cst_50 : f32 to vector<8x1xf32>
    %145 = arith.mulf %143, %144 : vector<8x1xf32>
    %cst_51 = arith.constant 9.99999974E-6 : f32
    %146 = vector.broadcast %cst_51 : f32 to vector<8x1xf32>
    %147 = arith.addf %145, %146 : vector<8x1xf32>
    %148 = math.rsqrt %147 : vector<8x1xf32>
    %149 = arith.mulf %1, %148 : vector<8x1xf32>
    %150 = vector.broadcast %149 : vector<8x1xf32> to vector<8x256xf32>
    %151 = arith.mulf %138, %150 : vector<8x256xf32>
    %152 = vector.broadcast %2 : vector<8x1xf32> to vector<8x256xf32>
    %153 = arith.addf %151, %152 : vector<8x256xf32>
    %154 = arith.addf %153, %0 : vector<8x256xf32>
    %cst_52 = arith.constant 0.000000e+00 : f32
    %155 = vector.broadcast %cst_52 : f32 to vector<8x256xf32>
    %156 = arith.maximumf %154, %155 : vector<8x256xf32>
    %c0_53 = arith.constant 0 : index
    %c0_54 = arith.constant 0 : index
    %157 = vector.load %arg4[%c0_53, %c0_54] : memref<8x256xf32, #tpu.memory_space<vmem>>, vector<8x256xf32>
    tpu.vector_store %arg4[%c0_53, %c0_54], %156 {strides = array<i32>} : memref<8x256xf32, #tpu.memory_space<vmem>>, vector<8x256xf32>,
    return
  }
}

</mosaic_0001>

<llo_original>
// kernel: tpu_custom_call.1
$region0: #{tpu_custom_call.1}
  #allocation0 [shape = 'u32[]', space=smem, size = 0x4, offset = 0x4, fixed_abs, tag = 'smem constant byte address 0x4 - core index']
  #allocation1 [shape = 'u32[72,128]{1,0:T(1,128)}', space=vmem, size = 0x9000, scoped, tag = 'internal scratch']
  %s0 = inlined_call_operand.hbm [shape: f32[8,256], index: 0, kind: input, shape index: {}]
  %s1 = inlined_call_operand.vmem [shape: f32[8,72], index: 1, kind: input, shape index: {}]
  %s2 = inlined_call_operand.hbm [shape: f32[8,72], index: 2, kind: input, shape index: {}]
  %s3 = inlined_call_operand.vmem [shape: f32[8,2], index: 3, kind: input, shape index: {}]
  %s4 = inlined_call_operand.hbm [shape: f32[8,256], index: 4, kind: output, shape index: {}]
  %s5 = sld [smem:[#allocation0]]
  $region34: #{tpu_custom_call.1} parent=0
    _
  %s7 = ssub.s32 1, %s5
  %s8 = scalar_select 0, %s7, %s5
  $region1: #{tpu_custom_call.1} parent=0
    #allocation2 [shape = 'u8[8192]{0}', space=vmem, size = 0x2000, scoped, tag = 'input window, operand 0, single buffered']
    #allocation3 [shape = 's32[1]{0}', space=sflag, size = 0x4, scoped, tag = 'scoped memory for tpu_custom_call.1']
    #allocation4 [shape = 's32[1]{0}', space=sflag, size = 0x4, scoped, tag = 'scoped memory for tpu_custom_call.1']
    #allocation5 [shape = 'u8[4096]{0}', space=vmem, size = 0x1000, scoped, tag = 'input window, operand 2, single buffered']
    #allocation6 [shape = 's32[1]{0}', space=sflag, size = 0x4, scoped, tag = 'scoped memory for tpu_custom_call.1']
    #allocation7 [shape = 'u8[8192]{0}', space=vmem, size = 0x2000, scoped, tag = 'output window, operand 0, single buffered']
    %9 = vsyncpa [#allocation3], 0
    %10 = vsyncpa [#allocation6], 0
    %11 = vsyncpa [#allocation4], 0
    // Predicated region
    $region2: #{tpu_custom_call.1} parent=1 // pred_check
      _
    $region3: #{tpu_custom_call.1} parent=1 // pred_check_branch
      %13 = sbr.rel (0) target = $region5
    $region4: #{tpu_custom_call.1} parent=1 // pred_region
      %15 = vsyncadd [#allocation3], 0
      %s17 = sshll.u32 %s0, 4
      %s18 = int_to_ptr.hbm [resolvable:$true] %s17
      %s19 = sshll.u32 [#allocation2], 4
      %s20 = int_to_ptr.vmem [resolvable:$true] %s19
      %22 = dma.hbm_to_vmem [thread:$0]  %s18, 256, %s20, [#allocation3]
    $region5: #{tpu_custom_call.1} parent=1 // pred_fallthru
      _
    // Predicated region
    $region6: #{tpu_custom_call.1} parent=1 // pred_check
      _
    $region7: #{tpu_custom_call.1} parent=1 // pred_check_branch
      %24 = sbr.rel (0) target = $region9
    $region8: #{tpu_custom_call.1} parent=1 // pred_region
      _
    $region9: #{tpu_custom_call.1} parent=1 // pred_fallthru
      _
    // Predicated region
    $region10: #{tpu_custom_call.1} parent=1 // pred_check
      _
    $region11: #{tpu_custom_call.1} parent=1 // pred_check_branch
      %26 = sbr.rel (0) target = $region13
    $region12: #{tpu_custom_call.1} parent=1 // pred_region
      %28 = vsyncadd [#allocation6], 0
      %s30 = sshll.u32 %s2, 4
      %s31 = int_to_ptr.hbm [resolvable:$true] %s30
      %s32 = sshll.u32 [#allocation5], 4
      %s33 = int_to_ptr.vmem [resolvable:$true] %s32
      %35 = dma.hbm_to_vmem [thread:$0]  %s31, 128, %s33, [#allocation6]
    $region13: #{tpu_custom_call.1} parent=1 // pred_fallthru
      _
    // Predicated region
    $region14: #{tpu_custom_call.1} parent=1 // pred_check
      _
    $region15: #{tpu_custom_call.1} parent=1 // pred_check_branch
      %37 = sbr.rel (0) target = $region17
    $region16: #{tpu_custom_call.1} parent=1 // pred_region
      _
    $region17: #{tpu_custom_call.1} parent=1 // pred_fallthru
      _
    // Predicated region
    $region18: #{tpu_custom_call.1} parent=1 // pred_check
      _
    $region19: #{tpu_custom_call.1} parent=1 // pred_check_branch
      %39 = sbr.rel (0) target = $region21
    $region20: #{tpu_custom_call.1} parent=1 // pred_region
      %41 = dma.done [#allocation3], 256
    $region21: #{tpu_custom_call.1} parent=1 // pred_fallthru
      _
    // Predicated region
    $region22: #{tpu_custom_call.1} parent=1 // pred_check
      _
    $region23: #{tpu_custom_call.1} parent=1 // pred_check_branch
      %43 = sbr.rel (0) target = $region25
    $region24: #{tpu_custom_call.1} parent=1 // pred_region
      %45 = dma.done [#allocation6], 128
    $region25: #{tpu_custom_call.1} parent=1 // pred_fallthru
      _
    %v46 = vld [vmem:[#allocation2] sm:$0xff]
    %v47 = vld [vmem:[#allocation2 + $0x8] sm:$0xff]
    %v48 = vld [vmem:[%s3] sm:$0xff]
    %v49 = vlaneseq
    %v50 = vand.u32 %v49, 127
    %v51 = vadd.s32 %v50, 128
    %v52 = vand.u32 %v50, 15
    %v53 = vand.u32 %v51, 15
    %v54 = vshra.s32 %v50, 4
    %v55 = vshra.s32 %v51, 4
    %vm56 = vcmp.gt.s32.totalorder %v52, 0
    %vm57 = vcmp.gt.s32.totalorder %v53, 0
    %vm58 = vcmp.lt.s32.totalorder %v52, 15
    %vm59 = vcmp.lt.s32.totalorder %v53, 15
    %vm60 = vcmp.gt.s32.totalorder %v54, 0
    %vm61 = vcmp.gt.s32.totalorder %v55, 0
    %vm62 = vcmp.lt.s32.totalorder %v54, 15
    %vm63 = vcmp.lt.s32.totalorder %v55, 15
    %vm64 = vmand %vm56, %vm60
    %vm65 = vmand %vm57, %vm61
    %vm66 = vmand %vm58, %vm60
    %vm67 = vmand %vm59, %vm61
    %vm68 = vmand %vm56, %vm62
    %vm69 = vmand %vm57, %vm63
    %vm70 = vmand %vm58, %vm62
    %vm71 = vmand %vm59, %vm63
    %v72 = vld [vmem:[%s1] sm:$0xff]
    %73 = vrot.lane.b32.xlu0 %v46, 17
    %v74 = vpop.permute.xlu0 %73
    %75 = vrot.lane.b32.xlu0 %v47, 17
    %v76 = vpop.permute.xlu0 %75
    %vm77 = vcmp.lt.s32.totalorder %v50, 17
    %v78 = vsel %vm77, %v74, %v76
    %v79 = vsel %vm77, %v76, %v74
    %v80 = vsel %vm64, 1, 0
    %v81 = vsel %vm65, 1, 0
    %vm82 = vcmp.eq.s32.totalorder %v80, 1
    %vm83 = vcmp.eq.s32.totalorder %v81, 1
    %v84 = vsel %vm82, %v79, 0.0
    %v85 = vsel %vm83, %v78, 0.0
    %86 = vrot.lane.b32.xlu0 %v46, 16
    %v87 = vpop.permute.xlu0 %86
    %88 = vrot.lane.b32.xlu0 %v47, 16
    %v89 = vpop.permute.xlu0 %88
    %vm90 = vcmp.lt.s32.totalorder %v50, 16
    %v91 = vsel %vm90, %v87, %v89
    %v92 = vsel %vm90, %v89, %v87
    %v93 = vsel %vm60, 1, 0
    %v94 = vsel %vm61, 1, 0
    %vm95 = vcmp.eq.s32.totalorder %v93, 1
    %vm96 = vcmp.eq.s32.totalorder %v94, 1
    %v97 = vsel %vm95, %v92, 0.0
    %v98 = vsel %vm96, %v91, 0.0
    %99 = vrot.lane.b32.xlu0 %v46, 15
    %v100 = vpop.permute.xlu0 %99
    %101 = vrot.lane.b32.xlu0 %v47, 15
    %v102 = vpop.permute.xlu0 %101
    %vm103 = vcmp.lt.s32.totalorder %v50, 15
    %v104 = vsel %vm103, %v100, %v102
    %v105 = vsel %vm103, %v102, %v100
    %v106 = vsel %vm66, 1, 0
    %v107 = vsel %vm67, 1, 0
    %vm108 = vcmp.eq.s32.totalorder %v106, 1
    %vm109 = vcmp.eq.s32.totalorder %v107, 1
    %v110 = vsel %vm108, %v105, 0.0
    %v111 = vsel %vm109, %v104, 0.0
    %112 = vrot.lane.b32.xlu0 %v46, 1
    %v113 = vpop.permute.xlu0 %112
    %114 = vrot.lane.b32.xlu0 %v47, 1
    %v115 = vpop.permute.xlu0 %114
    %vm116 = vcmp.lt.s32.totalorder %v50, 1
    %v117 = vsel %vm116, %v113, %v115
    %v118 = vsel %vm116, %v115, %v113
    %v119 = vsel %vm56, 1, 0
    %v120 = vsel %vm57, 1, 0
    %vm121 = vcmp.eq.s32.totalorder %v119, 1
    %vm122 = vcmp.eq.s32.totalorder %v120, 1
    %v123 = vsel %vm121, %v118, 0.0
    %v124 = vsel %vm122, %v117, 0.0
    %125 = vrot.lane.b32.xlu0 %v46, 127
    %v126 = vpop.permute.xlu0 %125
    %127 = vrot.lane.b32.xlu0 %v47, 127
    %v128 = vpop.permute.xlu0 %127
    %vm129 = vcmp.lt.s32.totalorder %v50, 127
    %v130 = vsel %vm129, %v126, %v128
    %v131 = vsel %vm129, %v128, %v126
    %v132 = vsel %vm58, 1, 0
    %v133 = vsel %vm59, 1, 0
    %vm134 = vcmp.eq.s32.totalorder %v132, 1
    %vm135 = vcmp.eq.s32.totalorder %v133, 1
    %v136 = vsel %vm134, %v130, 0.0
    %v137 = vsel %vm135, %v131, 0.0
    %138 = vrot.lane.b32.xlu0 %v46, 113
    %v139 = vpop.permute.xlu0 %138
    %140 = vrot.lane.b32.xlu0 %v47, 113
    %v141 = vpop.permute.xlu0 %140
    %vm142 = vcmp.lt.s32.totalorder %v50, 113
    %v143 = vsel %vm142, %v139, %v141
    %v144 = vsel %vm142, %v141, %v139
    %v145 = vsel %vm68, 1, 0
    %v146 = vsel %vm69, 1, 0
    %vm147 = vcmp.eq.s32.totalorder %v145, 1
    %vm148 = vcmp.eq.s32.totalorder %v146, 1
    %v149 = vsel %vm147, %v143, 0.0
    %v150 = vsel %vm148, %v144, 0.0
    %151 = vrot.lane.b32.xlu0 %v46, 112
    %v152 = vpop.permute.xlu0 %151
    %153 = vrot.lane.b32.xlu0 %v47, 112
    %v154 = vpop.permute.xlu0 %153
    %vm155 = vcmp.lt.s32.totalorder %v50, 112
    %v156 = vsel %vm155, %v152, %v154
    %v157 = vsel %vm155, %v154, %v152
    %v158 = vsel %vm62, 1, 0
    %v159 = vsel %vm63, 1, 0
    %vm160 = vcmp.eq.s32.totalorder %v158, 1
    %vm161 = vcmp.eq.s32.totalorder %v159, 1
    %v162 = vsel %vm160, %v156, 0.0
    %v163 = vsel %vm161, %v157, 0.0
    %164 = vrot.lane.b32.xlu0 %v46, 111
    %v165 = vpop.permute.xlu0 %164
    %166 = vrot.lane.b32.xlu0 %v47, 111
    %v167 = vpop.permute.xlu0 %166
    %vm168 = vcmp.lt.s32.totalorder %v50, 111
    %v169 = vsel %vm168, %v165, %v167
    %v170 = vsel %vm168, %v167, %v165
    %v171 = vsel %vm70, 1, 0
    %v172 = vsel %vm71, 1, 0
    %vm173 = vcmp.eq.s32.totalorder %v171, 1
    %vm174 = vcmp.eq.s32.totalorder %v172, 1
    %v175 = vsel %vm173, %v169, 0.0
    %v176 = vsel %vm174, %v170, 0.0
    %vm177 = vcmask 588800
    %v179 = vsel %vm177, %v72, 0
    %181 = vmatpush.msra.mxu0 0.0
    %182 = vmatpush.msra.mxu0 0.0
    %183 = vmatpush.msra.mxu0 0.0
    %184 = vmatpush.msra.mxu0 0.0
    %185 = vmatpush.msra.mxu0 0.0
    %186 = vmatpush.msra.mxu0 0.0
    %187 = vmatpush.msra.mxu0 0.0
    %v188 = vand.u32 %v175, 4294901760
    %189 = vmatpush.msra.mxu0 %v188
    %v190 = vand.u32 %v162, 4294901760
    %191 = vmatpush.msra.mxu0 %v190
    %v192 = vand.u32 %v149, 4294901760
    %193 = vmatpush.msra.mxu0 %v192
    %v194 = vand.u32 %v136, 4294901760
    %195 = vmatpush.msra.mxu0 %v194
    %v196 = vand.u32 %v46, 4294901760
    %197 = vmatpush.msra.mxu0 %v196
    %v198 = vand.u32 %v123, 4294901760
    %199 = vmatpush.msra.mxu0 %v198
    %v200 = vand.u32 %v110, 4294901760
    %201 = vmatpush.msra.mxu0 %v200
    %v202 = vand.u32 %v97, 4294901760
    %203 = vmatpush.msra.mxu0 %v202
    %v204 = vand.u32 %v84, 4294901760
    %205 = vmatpush.msra.mxu0 %v204
    %v206 = vand.u32 %v179, 4294901760
    %v207 = vsub.f32 %v179, %v206
    %v208 = vand.u32 %v207, 4294901760
    %v209 = vsub.f32 %v207, %v208
    %v210 = vand.u32 %v209, 4294901760
    %211 = vmatmul.f32.gmra.mxu0 %v210
    %v212 = vpop.f32.mrf.mxu0
    %v213 = vadd.f32 0.0, %v212
    %214 = vdwg.mxu0
    %215 = vmatpush.msra.mxu0 0.0
    %216 = vmatpush.msra.mxu0 0.0
    %217 = vmatpush.msra.mxu0 0.0
    %218 = vmatpush.msra.mxu0 0.0
    %219 = vmatpush.msra.mxu0 0.0
    %220 = vmatpush.msra.mxu0 0.0
    %221 = vmatpush.msra.mxu0 0.0
    %v222 = vand.u32 %v175, 4294901760
    %v223 = vsub.f32 %v175, %v222
    %v224 = vand.u32 %v223, 4294901760
    %v225 = vsub.f32 %v223, %v224
    %v226 = vand.u32 %v225, 4294901760
    %227 = vmatpush.msra.mxu0 %v226
    %v228 = vand.u32 %v162, 4294901760
    %v229 = vsub.f32 %v162, %v228
    %v230 = vand.u32 %v229, 4294901760
    %v231 = vsub.f32 %v229, %v230
    %v232 = vand.u32 %v231, 4294901760
    %233 = vmatpush.msra.mxu0 %v232
    %v234 = vand.u32 %v149, 4294901760
    %v235 = vsub.f32 %v149, %v234
    %v236 = vand.u32 %v235, 4294901760
    %v237 = vsub.f32 %v235, %v236
    %v238 = vand.u32 %v237, 4294901760
    %239 = vmatpush.msra.mxu0 %v238
    %v240 = vand.u32 %v136, 4294901760
    %v241 = vsub.f32 %v136, %v240
    %v242 = vand.u32 %v241, 4294901760
    %v243 = vsub.f32 %v241, %v242
    %v244 = vand.u32 %v243, 4294901760
    %245 = vmatpush.msra.mxu0 %v244
    %v246 = vand.u32 %v46, 4294901760
    %v247 = vsub.f32 %v46, %v246
    %v248 = vand.u32 %v247, 4294901760
    %v249 = vsub.f32 %v247, %v248
    %v250 = vand.u32 %v249, 4294901760
    %251 = vmatpush.msra.mxu0 %v250
    %v252 = vand.u32 %v123, 4294901760
    %v253 = vsub.f32 %v123, %v252
    %v254 = vand.u32 %v253, 4294901760
    %v255 = vsub.f32 %v253, %v254
    %v256 = vand.u32 %v255, 4294901760
    %257 = vmatpush.msra.mxu0 %v256
    %v258 = vand.u32 %v110, 4294901760
    %v259 = vsub.f32 %v110, %v258
    %v260 = vand.u32 %v259, 4294901760
    %v261 = vsub.f32 %v259, %v260
    %v262 = vand.u32 %v261, 4294901760
    %263 = vmatpush.msra.mxu0 %v262
    %v264 = vand.u32 %v97, 4294901760
    %v265 = vsub.f32 %v97, %v264
    %v266 = vand.u32 %v265, 4294901760
    %v267 = vsub.f32 %v265, %v266
    %v268 = vand.u32 %v267, 4294901760
    %269 = vmatpush.msra.mxu0 %v268
    %v270 = vand.u32 %v84, 4294901760
    %v271 = vsub.f32 %v84, %v270
    %v272 = vand.u32 %v271, 4294901760
    %v273 = vsub.f32 %v271, %v272
    %v274 = vand.u32 %v273, 4294901760
    %275 = vmatpush.msra.mxu0 %v274
    %v276 = vand.u32 %v179, 4294901760
    %277 = vmatmul.f32.gmra.mxu0 %v276
    %v278 = vpop.f32.mrf.mxu0
    %v279 = vadd.f32 %v213, %v278
    %280 = vdwg.mxu0
    %281 = vmatpush.msra.mxu0 0.0
    %282 = vmatpush.msra.mxu0 0.0
    %283 = vmatpush.msra.mxu0 0.0
    %284 = vmatpush.msra.mxu0 0.0
    %285 = vmatpush.msra.mxu0 0.0
    %286 = vmatpush.msra.mxu0 0.0
    %287 = vmatpush.msra.mxu0 0.0
    %v288 = vand.u32 %v175, 4294901760
    %v289 = vsub.f32 %v175, %v288
    %290 = vmatpush.msra.mxu0 %v289
    %v291 = vand.u32 %v162, 4294901760
    %v292 = vsub.f32 %v162, %v291
    %293 = vmatpush.msra.mxu0 %v292
    %v294 = vand.u32 %v149, 4294901760
    %v295 = vsub.f32 %v149, %v294
    %296 = vmatpush.msra.mxu0 %v295
    %v297 = vand.u32 %v136, 4294901760
    %v298 = vsub.f32 %v136, %v297
    %299 = vmatpush.msra.mxu0 %v298
    %v300 = vand.u32 %v46, 4294901760
    %v301 = vsub.f32 %v46, %v300
    %302 = vmatpush.msra.mxu0 %v301
    %v303 = vand.u32 %v123, 4294901760
    %v304 = vsub.f32 %v123, %v303
    %305 = vmatpush.msra.mxu0 %v304
    %v306 = vand.u32 %v110, 4294901760
    %v307 = vsub.f32 %v110, %v306
    %308 = vmatpush.msra.mxu0 %v307
    %v309 = vand.u32 %v97, 4294901760
    %v310 = vsub.f32 %v97, %v309
    %311 = vmatpush.msra.mxu0 %v310
    %v312 = vand.u32 %v84, 4294901760
    %v313 = vsub.f32 %v84, %v312
    %314 = vmatpush.msra.mxu0 %v313
    %v315 = vand.u32 %v179, 4294901760
    %v316 = vsub.f32 %v179, %v315
    %317 = vmatmul.f32.gmra.mxu0 %v316
    %v318 = vpop.f32.mrf.mxu0
    %v319 = vadd.f32 %v279, %v318
    %320 = vdwg.mxu0
    %321 = vmatpush.msra.mxu0 0.0
    %322 = vmatpush.msra.mxu0 0.0
    %323 = vmatpush.msra.mxu0 0.0
    %324 = vmatpush.msra.mxu0 0.0
    %325 = vmatpush.msra.mxu0 0.0
    %326 = vmatpush.msra.mxu0 0.0
    %327 = vmatpush.msra.mxu0 0.0
    %v328 = vand.u32 %v175, 4294901760
    %329 = vmatpush.msra.mxu0 %v328
    %v330 = vand.u32 %v162, 4294901760
    %331 = vmatpush.msra.mxu0 %v330
    %v332 = vand.u32 %v149, 4294901760
    %333 = vmatpush.msra.mxu0 %v332
    %v334 = vand.u32 %v136, 4294901760
    %335 = vmatpush.msra.mxu0 %v334
    %v336 = vand.u32 %v46, 4294901760
    %337 = vmatpush.msra.mxu0 %v336
    %v338 = vand.u32 %v123, 4294901760
    %339 = vmatpush.msra.mxu0 %v338
    %v340 = vand.u32 %v110, 4294901760
    %341 = vmatpush.msra.mxu0 %v340
    %v342 = vand.u32 %v97, 4294901760
    %343 = vmatpush.msra.mxu0 %v342
    %v344 = vand.u32 %v84, 4294901760
    %345 = vmatpush.msra.mxu0 %v344
    %v346 = vand.u32 %v179, 4294901760
    %v347 = vsub.f32 %v179, %v346
    %v348 = vand.u32 %v347, 4294901760
    %349 = vmatmul.f32.gmra.mxu0 %v348
    %v350 = vpop.f32.mrf.mxu0
    %v351 = vadd.f32 %v319, %v350
    %352 = vdwg.mxu0
    %353 = vmatpush.msra.mxu0 0.0
    %354 = vmatpush.msra.mxu0 0.0
    %355 = vmatpush.msra.mxu0 0.0
    %356 = vmatpush.msra.mxu0 0.0
    %357 = vmatpush.msra.mxu0 0.0
    %358 = vmatpush.msra.mxu0 0.0
    %359 = vmatpush.msra.mxu0 0.0
    %v360 = vand.u32 %v175, 4294901760
    %v361 = vsub.f32 %v175, %v360
    %v362 = vand.u32 %v361, 4294901760
    %363 = vmatpush.msra.mxu0 %v362
    %v364 = vand.u32 %v162, 4294901760
    %v365 = vsub.f32 %v162, %v364
    %v366 = vand.u32 %v365, 4294901760
    %367 = vmatpush.msra.mxu0 %v366
    %v368 = vand.u32 %v149, 4294901760
    %v369 = vsub.f32 %v149, %v368
    %v370 = vand.u32 %v369, 4294901760
    %371 = vmatpush.msra.mxu0 %v370
    %v372 = vand.u32 %v136, 4294901760
    %v373 = vsub.f32 %v136, %v372
    %v374 = vand.u32 %v373, 4294901760
    %375 = vmatpush.msra.mxu0 %v374
    %v376 = vand.u32 %v46, 4294901760
    %v377 = vsub.f32 %v46, %v376
    %v378 = vand.u32 %v377, 4294901760
    %379 = vmatpush.msra.mxu0 %v378
    %v380 = vand.u32 %v123, 4294901760
    %v381 = vsub.f32 %v123, %v380
    %v382 = vand.u32 %v381, 4294901760
    %383 = vmatpush.msra.mxu0 %v382
    %v384 = vand.u32 %v110, 4294901760
    %v385 = vsub.f32 %v110, %v384
    %v386 = vand.u32 %v385, 4294901760
    %387 = vmatpush.msra.mxu0 %v386
    %v388 = vand.u32 %v97, 4294901760
    %v389 = vsub.f32 %v97, %v388
    %v390 = vand.u32 %v389, 4294901760
    %391 = vmatpush.msra.mxu0 %v390
    %v392 = vand.u32 %v84, 4294901760
    %v393 = vsub.f32 %v84, %v392
    %v394 = vand.u32 %v393, 4294901760
    %395 = vmatpush.msra.mxu0 %v394
    %v396 = vand.u32 %v179, 4294901760
    %397 = vmatmul.f32.gmra.mxu0 %v396
    %v398 = vpop.f32.mrf.mxu0
    %v399 = vadd.f32 %v351, %v398
    %400 = vdwg.mxu0
    %401 = vmatpush.msra.mxu0 0.0
    %402 = vmatpush.msra.mxu0 0.0
    %403 = vmatpush.msra.mxu0 0.0
    %404 = vmatpush.msra.mxu0 0.0
    %405 = vmatpush.msra.mxu0 0.0
    %406 = vmatpush.msra.mxu0 0.0
    %407 = vmatpush.msra.mxu0 0.0
    %v408 = vand.u32 %v175, 4294901760
    %409 = vmatpush.msra.mxu0 %v408
    %v410 = vand.u32 %v162, 4294901760
    %411 = vmatpush.msra.mxu0 %v410
    %v412 = vand.u32 %v149, 4294901760
    %413 = vmatpush.msra.mxu0 %v412
    %v414 = vand.u32 %v136, 4294901760
    %415 = vmatpush.msra.mxu0 %v414
    %v416 = vand.u32 %v46, 4294901760
    %417 = vmatpush.msra.mxu0 %v416
    %v418 = vand.u32 %v123, 4294901760
    %419 = vmatpush.msra.mxu0 %v418
    %v420 = vand.u32 %v110, 4294901760
    %421 = vmatpush.msra.mxu0 %v420
    %v422 = vand.u32 %v97, 4294901760
    %423 = vmatpush.msra.mxu0 %v422
    %v424 = vand.u32 %v84, 4294901760
    %425 = vmatpush.msra.mxu0 %v424
    %v426 = vand.u32 %v179, 4294901760
    %427 = vmatmul.f32.gmra.mxu0 %v426
    %v428 = vpop.f32.mrf.mxu0
    %v429 = vadd.f32 %v399, %v428
    %430 = vdwg.mxu0
    %431 = vmatpush.msra.mxu0 0.0
    %432 = vmatpush.msra.mxu0 0.0
    %433 = vmatpush.msra.mxu0 0.0
    %434 = vmatpush.msra.mxu0 0.0
    %435 = vmatpush.msra.mxu0 0.0
    %436 = vmatpush.msra.mxu0 0.0
    %437 = vmatpush.msra.mxu0 0.0
    %v438 = vand.u32 %v176, 4294901760
    %439 = vmatpush.msra.mxu0 %v438
    %v440 = vand.u32 %v163, 4294901760
    %441 = vmatpush.msra.mxu0 %v440
    %v442 = vand.u32 %v150, 4294901760
    %443 = vmatpush.msra.mxu0 %v442
    %v444 = vand.u32 %v137, 4294901760
    %445 = vmatpush.msra.mxu0 %v444
    %v446 = vand.u32 %v47, 4294901760
    %447 = vmatpush.msra.mxu0 %v446
    %v448 = vand.u32 %v124, 4294901760
    %449 = vmatpush.msra.mxu0 %v448
    %v450 = vand.u32 %v111, 4294901760
    %451 = vmatpush.msra.mxu0 %v450
    %v452 = vand.u32 %v98, 4294901760
    %453 = vmatpush.msra.mxu0 %v452
    %v454 = vand.u32 %v85, 4294901760
    %455 = vmatpush.msra.mxu0 %v454
    %v456 = vand.u32 %v179, 4294901760
    %v457 = vsub.f32 %v179, %v456
    %v458 = vand.u32 %v457, 4294901760
    %v459 = vsub.f32 %v457, %v458
    %v460 = vand.u32 %v459, 4294901760
    %461 = vmatmul.f32.gmra.mxu0 %v460
    %v462 = vpop.f32.mrf.mxu0
    %v463 = vadd.f32 0.0, %v462
    %464 = vdwg.mxu0
    %465 = vmatpush.msra.mxu0 0.0
    %466 = vmatpush.msra.mxu0 0.0
    %467 = vmatpush.msra.mxu0 0.0
    %468 = vmatpush.msra.mxu0 0.0
    %469 = vmatpush.msra.mxu0 0.0
    %470 = vmatpush.msra.mxu0 0.0
    %471 = vmatpush.msra.mxu0 0.0
    %v472 = vand.u32 %v176, 4294901760
    %v473 = vsub.f32 %v176, %v472
    %v474 = vand.u32 %v473, 4294901760
    %v475 = vsub.f32 %v473, %v474
    %v476 = vand.u32 %v475, 4294901760
    %477 = vmatpush.msra.mxu0 %v476
    %v478 = vand.u32 %v163, 4294901760
    %v479 = vsub.f32 %v163, %v478
    %v480 = vand.u32 %v479, 4294901760
    %v481 = vsub.f32 %v479, %v480
    %v482 = vand.u32 %v481, 4294901760
    %483 = vmatpush.msra.mxu0 %v482
    %v484 = vand.u32 %v150, 4294901760
    %v485 = vsub.f32 %v150, %v484
    %v486 = vand.u32 %v485, 4294901760
    %v487 = vsub.f32 %v485, %v486
    %v488 = vand.u32 %v487, 4294901760
    %489 = vmatpush.msra.mxu0 %v488
    %v490 = vand.u32 %v137, 4294901760
    %v491 = vsub.f32 %v137, %v490
    %v492 = vand.u32 %v491, 4294901760
    %v493 = vsub.f32 %v491, %v492
    %v494 = vand.u32 %v493, 4294901760
    %495 = vmatpush.msra.mxu0 %v494
    %v496 = vand.u32 %v47, 4294901760
    %v497 = vsub.f32 %v47, %v496
    %v498 = vand.u32 %v497, 4294901760
    %v499 = vsub.f32 %v497, %v498
    %v500 = vand.u32 %v499, 4294901760
    %501 = vmatpush.msra.mxu0 %v500
    %v502 = vand.u32 %v124, 4294901760
    %v503 = vsub.f32 %v124, %v502
    %v504 = vand.u32 %v503, 4294901760
    %v505 = vsub.f32 %v503, %v504
    %v506 = vand.u32 %v505, 4294901760
    %507 = vmatpush.msra.mxu0 %v506
    %v508 = vand.u32 %v111, 4294901760
    %v509 = vsub.f32 %v111, %v508
    %v510 = vand.u32 %v509, 4294901760
    %v511 = vsub.f32 %v509, %v510
    %v512 = vand.u32 %v511, 4294901760
    %513 = vmatpush.msra.mxu0 %v512
    %v514 = vand.u32 %v98, 4294901760
    %v515 = vsub.f32 %v98, %v514
    %v516 = vand.u32 %v515, 4294901760
    %v517 = vsub.f32 %v515, %v516
    %v518 = vand.u32 %v517, 4294901760
    %519 = vmatpush.msra.mxu0 %v518
    %v520 = vand.u32 %v85, 4294901760
    %v521 = vsub.f32 %v85, %v520
    %v522 = vand.u32 %v521, 4294901760
    %v523 = vsub.f32 %v521, %v522
    %v524 = vand.u32 %v523, 4294901760
    %525 = vmatpush.msra.mxu0 %v524
    %v526 = vand.u32 %v179, 4294901760
    %527 = vmatmul.f32.gmra.mxu0 %v526
    %v528 = vpop.f32.mrf.mxu0
    %v529 = vadd.f32 %v463, %v528
    %530 = vdwg.mxu0
    %531 = vmatpush.msra.mxu0 0.0
    %532 = vmatpush.msra.mxu0 0.0
    %533 = vmatpush.msra.mxu0 0.0
    %534 = vmatpush.msra.mxu0 0.0
    %535 = vmatpush.msra.mxu0 0.0
    %536 = vmatpush.msra.mxu0 0.0
    %537 = vmatpush.msra.mxu0 0.0
    %v538 = vand.u32 %v176, 4294901760
    %v539 = vsub.f32 %v176, %v538
    %540 = vmatpush.msra.mxu0 %v539
    %v541 = vand.u32 %v163, 4294901760
    %v542 = vsub.f32 %v163, %v541
    %543 = vmatpush.msra.mxu0 %v542
    %v544 = vand.u32 %v150, 4294901760
    %v545 = vsub.f32 %v150, %v544
    %546 = vmatpush.msra.mxu0 %v545
    %v547 = vand.u32 %v137, 4294901760
    %v548 = vsub.f32 %v137, %v547
    %549 = vmatpush.msra.mxu0 %v548
    %v550 = vand.u32 %v47, 4294901760
    %v551 = vsub.f32 %v47, %v550
    %552 = vmatpush.msra.mxu0 %v551
    %v553 = vand.u32 %v124, 4294901760
    %v554 = vsub.f32 %v124, %v553
    %555 = vmatpush.msra.mxu0 %v554
    %v556 = vand.u32 %v111, 4294901760
    %v557 = vsub.f32 %v111, %v556
    %558 = vmatpush.msra.mxu0 %v557
    %v559 = vand.u32 %v98, 4294901760
    %v560 = vsub.f32 %v98, %v559
    %561 = vmatpush.msra.mxu0 %v560
    %v562 = vand.u32 %v85, 4294901760
    %v563 = vsub.f32 %v85, %v562
    %564 = vmatpush.msra.mxu0 %v563
    %v565 = vand.u32 %v179, 4294901760
    %v566 = vsub.f32 %v179, %v565
    %567 = vmatmul.f32.gmra.mxu0 %v566
    %v568 = vpop.f32.mrf.mxu0
    %v569 = vadd.f32 %v529, %v568
    %570 = vdwg.mxu0
    %571 = vmatpush.msra.mxu0 0.0
    %572 = vmatpush.msra.mxu0 0.0
    %573 = vmatpush.msra.mxu0 0.0
    %574 = vmatpush.msra.mxu0 0.0
    %575 = vmatpush.msra.mxu0 0.0
    %576 = vmatpush.msra.mxu0 0.0
    %577 = vmatpush.msra.mxu0 0.0
    %v578 = vand.u32 %v176, 4294901760
    %579 = vmatpush.msra.mxu0 %v578
    %v580 = vand.u32 %v163, 4294901760
    %581 = vmatpush.msra.mxu0 %v580
    %v582 = vand.u32 %v150, 4294901760
    %583 = vmatpush.msra.mxu0 %v582
    %v584 = vand.u32 %v137, 4294901760
    %585 = vmatpush.msra.mxu0 %v584
    %v586 = vand.u32 %v47, 4294901760
    %587 = vmatpush.msra.mxu0 %v586
    %v588 = vand.u32 %v124, 4294901760
    %589 = vmatpush.msra.mxu0 %v588
    %v590 = vand.u32 %v111, 4294901760
    %591 = vmatpush.msra.mxu0 %v590
    %v592 = vand.u32 %v98, 4294901760
    %593 = vmatpush.msra.mxu0 %v592
    %v594 = vand.u32 %v85, 4294901760
    %595 = vmatpush.msra.mxu0 %v594
    %v596 = vand.u32 %v179, 4294901760
    %v597 = vsub.f32 %v179, %v596
    %v598 = vand.u32 %v597, 4294901760
    %599 = vmatmul.f32.gmra.mxu0 %v598
    %v600 = vpop.f32.mrf.mxu0
    %v601 = vadd.f32 %v569, %v600
    %602 = vdwg.mxu0
    %603 = vmatpush.msra.mxu0 0.0
    %604 = vmatpush.msra.mxu0 0.0
    %605 = vmatpush.msra.mxu0 0.0
    %606 = vmatpush.msra.mxu0 0.0
    %607 = vmatpush.msra.mxu0 0.0
    %608 = vmatpush.msra.mxu0 0.0
    %609 = vmatpush.msra.mxu0 0.0
    %v610 = vand.u32 %v176, 4294901760
    %v611 = vsub.f32 %v176, %v610
    %v612 = vand.u32 %v611, 4294901760
    %613 = vmatpush.msra.mxu0 %v612
    %v614 = vand.u32 %v163, 4294901760
    %v615 = vsub.f32 %v163, %v614
    %v616 = vand.u32 %v615, 4294901760
    %617 = vmatpush.msra.mxu0 %v616
    %v618 = vand.u32 %v150, 4294901760
    %v619 = vsub.f32 %v150, %v618
    %v620 = vand.u32 %v619, 4294901760
    %621 = vmatpush.msra.mxu0 %v620
    %v622 = vand.u32 %v137, 4294901760
    %v623 = vsub.f32 %v137, %v622
    %v624 = vand.u32 %v623, 4294901760
    %625 = vmatpush.msra.mxu0 %v624
    %v626 = vand.u32 %v47, 4294901760
    %v627 = vsub.f32 %v47, %v626
    %v628 = vand.u32 %v627, 4294901760
    %629 = vmatpush.msra.mxu0 %v628
    %v630 = vand.u32 %v124, 4294901760
    %v631 = vsub.f32 %v124, %v630
    %v632 = vand.u32 %v631, 4294901760
    %633 = vmatpush.msra.mxu0 %v632
    %v634 = vand.u32 %v111, 4294901760
    %v635 = vsub.f32 %v111, %v634
    %v636 = vand.u32 %v635, 4294901760
    %637 = vmatpush.msra.mxu0 %v636
    %v638 = vand.u32 %v98, 4294901760
    %v639 = vsub.f32 %v98, %v638
    %v640 = vand.u32 %v639, 4294901760
    %641 = vmatpush.msra.mxu0 %v640
    %v642 = vand.u32 %v85, 4294901760
    %v643 = vsub.f32 %v85, %v642
    %v644 = vand.u32 %v643, 4294901760
    %645 = vmatpush.msra.mxu0 %v644
    %v646 = vand.u32 %v179, 4294901760
    %647 = vmatmul.f32.gmra.mxu0 %v646
    %v648 = vpop.f32.mrf.mxu0
    %v649 = vadd.f32 %v601, %v648
    %650 = vdwg.mxu0
    %651 = vmatpush.msra.mxu0 0.0
    %652 = vmatpush.msra.mxu0 0.0
    %653 = vmatpush.msra.mxu0 0.0
    %654 = vmatpush.msra.mxu0 0.0
    %655 = vmatpush.msra.mxu0 0.0
    %656 = vmatpush.msra.mxu0 0.0
    %657 = vmatpush.msra.mxu0 0.0
    %v658 = vand.u32 %v176, 4294901760
    %659 = vmatpush.msra.mxu0 %v658
    %v660 = vand.u32 %v163, 4294901760
    %661 = vmatpush.msra.mxu0 %v660
    %v662 = vand.u32 %v150, 4294901760
    %663 = vmatpush.msra.mxu0 %v662
    %v664 = vand.u32 %v137, 4294901760
    %665 = vmatpush.msra.mxu0 %v664
    %v666 = vand.u32 %v47, 4294901760
    %667 = vmatpush.msra.mxu0 %v666
    %v668 = vand.u32 %v124, 4294901760
    %669 = vmatpush.msra.mxu0 %v668
    %v670 = vand.u32 %v111, 4294901760
    %671 = vmatpush.msra.mxu0 %v670
    %v672 = vand.u32 %v98, 4294901760
    %673 = vmatpush.msra.mxu0 %v672
    %v674 = vand.u32 %v85, 4294901760
    %675 = vmatpush.msra.mxu0 %v674
    %v676 = vand.u32 %v179, 4294901760
    %677 = vmatmul.f32.gmra.mxu0 %v676
    %v678 = vpop.f32.mrf.mxu0
    %v679 = vadd.f32 %v649, %v678
    %680 = vdwg.mxu0
    %v681 = vadd.f32 %v429, %v679
    %682 = vadd.xlane.f32.xlu0 %v681
    %v683 = vpop.xlane.xlu0 %682
    %v684 = vrot.slane %v683, 4
    %v685 = vadd.f32 %v683, %v684
    %v686 = vmul.f32 %v685, 0.001953125
    %688 = vset.pattern.permute.xlu0 0
    %689 = vperm.xlu0 %688, %v686
    %v690 = vpop.permute.xlu0 %689
    %v692 = vsub.f32 %v429, %v690
    %v693 = vsub.f32 %v679, %v690
    %v694 = vmul.f32 %v692, %v692
    %v695 = vmul.f32 %v693, %v693
    %v696 = vadd.f32 %v694, %v695
    %697 = vadd.xlane.f32.xlu0 %v696
    %v698 = vpop.xlane.xlu0 %697
    %v699 = vrot.slane %v698, 4
    %v700 = vadd.f32 %v698, %v699
    %v701 = vmul.f32 %v700, 0.001953125
    %v702 = vadd.f32 %v701, 1e-05
    %v703 = vrsqrt.pop %v702
    %v704 = vmul.f32 %v703, %v702
    %v705 = vmul.f32 %v704, %v703
    %v706 = vmul.f32 0.5, %v705
    %v707 = vsub.f32 1.5, %v706
    %v708 = vmul.f32 %v703, %v707
    %vm709 = vweird.f32 %v702
    %vm710 = vweird.f32 %v703
    %vm711 = vmor %vm709, %vm710
    %v712 = vsel %vm711, %v703, %v708
    %v713 = vmul.f32 %v48, %v712
    %715 = vset.pattern.permute.xlu0 0
    %716 = vperm.xlu0 %715, %v713
    %v717 = vpop.permute.xlu0 %716
    %v719 = vmul.f32 %v692, %v717
    %v720 = vmul.f32 %v693, %v717
    %722 = vset.pattern.permute.xlu0 1
    %723 = vperm.xlu0 %722, %v48
    %v724 = vpop.permute.xlu0 %723
    %v726 = vadd.f32 %v719, %v724
    %v727 = vadd.f32 %v720, %v724
    %v728 = vmax.f32 %v726, 0.0
    %v729 = vmax.f32 %v727, 0.0
    %v730 = vld [vmem:[#allocation5] sm:$0xff]
    %731 = vrot.lane.b32.xlu0 %v728, 17
    %v732 = vpop.permute.xlu0 %731
    %733 = vrot.lane.b32.xlu0 %v729, 17
    %v734 = vpop.permute.xlu0 %733
    %v735 = vsel %vm77, %v732, %v734
    %v736 = vsel %vm77, %v734, %v732
    %v737 = vsel %vm82, %v736, 0.0
    %v738 = vsel %vm83, %v735, 0.0
    %739 = vrot.lane.b32.xlu0 %v728, 16
    %v740 = vpop.permute.xlu0 %739
    %741 = vrot.lane.b32.xlu0 %v729, 16
    %v742 = vpop.permute.xlu0 %741
    %v743 = vsel %vm90, %v740, %v742
    %v744 = vsel %vm90, %v742, %v740
    %v745 = vsel %vm95, %v744, 0.0
    %v746 = vsel %vm96, %v743, 0.0
    %747 = vrot.lane.b32.xlu0 %v728, 15
    %v748 = vpop.permute.xlu0 %747
    %749 = vrot.lane.b32.xlu0 %v729, 15
    %v750 = vpop.permute.xlu0 %749
    %v751 = vsel %vm103, %v748, %v750
    %v752 = vsel %vm103, %v750, %v748
    %v753 = vsel %vm108, %v752, 0.0
    %v754 = vsel %vm109, %v751, 0.0
    %755 = vrot.lane.b32.xlu0 %v728, 1
    %v756 = vpop.permute.xlu0 %755
    %757 = vrot.lane.b32.xlu0 %v729, 1
    %v758 = vpop.permute.xlu0 %757
    %v759 = vsel %vm116, %v756, %v758
    %v760 = vsel %vm116, %v758, %v756
    %v761 = vsel %vm121, %v760, 0.0
    %v762 = vsel %vm122, %v759, 0.0
    %763 = vrot.lane.b32.xlu0 %v728, 127
    %v764 = vpop.permute.xlu0 %763
    %765 = vrot.lane.b32.xlu0 %v729, 127
    %v766 = vpop.permute.xlu0 %765
    %v767 = vsel %vm129, %v764, %v766
    %v768 = vsel %vm129, %v766, %v764
    %v769 = vsel %vm134, %v767, 0.0
    %v770 = vsel %vm135, %v768, 0.0
    %771 = vrot.lane.b32.xlu0 %v728, 113
    %v772 = vpop.permute.xlu0 %771
    %773 = vrot.lane.b32.xlu0 %v729, 113
    %v774 = vpop.permute.xlu0 %773
    %v775 = vsel %vm142, %v772, %v774
    %v776 = vsel %vm142, %v774, %v772
    %v777 = vsel %vm147, %v775, 0.0
    %v778 = vsel %vm148, %v776, 0.0
    %779 = vrot.lane.b32.xlu0 %v728, 112
    %v780 = vpop.permute.xlu0 %779
    %781 = vrot.lane.b32.xlu0 %v729, 112
    %v782 = vpop.permute.xlu0 %781
    %v783 = vsel %vm155, %v780, %v782
    %v784 = vsel %vm155, %v782, %v780
    %v785 = vsel %vm160, %v783, 0.0
    %v786 = vsel %vm161, %v784, 0.0
    %787 = vrot.lane.b32.xlu0 %v728, 111
    %v788 = vpop.permute.xlu0 %787
    %789 = vrot.lane.b32.xlu0 %v729, 111
    %v790 = vpop.permute.xlu0 %789
    %v791 = vsel %vm168, %v788, %v790
    %v792 = vsel %vm168, %v790, %v788
    %v793 = vsel %vm173, %v791, 0.0
    %v794 = vsel %vm174, %v792, 0.0
    %v796 = vsel %vm177, %v730, 0
    %798 = vmatpush.msra.mxu0 0.0
    %799 = vmatpush.msra.mxu0 0.0
    %800 = vmatpush.msra.mxu0 0.0
    %801 = vmatpush.msra.mxu0 0.0
    %802 = vmatpush.msra.mxu0 0.0
    %803 = vmatpush.msra.mxu0 0.0
    %804 = vmatpush.msra.mxu0 0.0
    %v805 = vand.u32 %v793, 4294901760
    %806 = vmatpush.msra.mxu0 %v805
    %v807 = vand.u32 %v785, 4294901760
    %808 = vmatpush.msra.mxu0 %v807
    %v809 = vand.u32 %v777, 4294901760
    %810 = vmatpush.msra.mxu0 %v809
    %v811 = vand.u32 %v769, 4294901760
    %812 = vmatpush.msra.mxu0 %v811
    %v813 = vand.u32 %v728, 4294901760
    %814 = vmatpush.msra.mxu0 %v813
    %v815 = vand.u32 %v761, 4294901760
    %816 = vmatpush.msra.mxu0 %v815
    %v817 = vand.u32 %v753, 4294901760
    %818 = vmatpush.msra.mxu0 %v817
    %v819 = vand.u32 %v745, 4294901760
    %820 = vmatpush.msra.mxu0 %v819
    %v821 = vand.u32 %v737, 4294901760
    %822 = vmatpush.msra.mxu0 %v821
    %v823 = vand.u32 %v796, 4294901760
    %v824 = vsub.f32 %v796, %v823
    %v825 = vand.u32 %v824, 4294901760
    %v826 = vsub.f32 %v824, %v825
    %v827 = vand.u32 %v826, 4294901760
    %828 = vmatmul.f32.gmra.mxu0 %v827
    %v829 = vpop.f32.mrf.mxu0
    %v830 = vadd.f32 0.0, %v829
    %831 = vdwg.mxu0
    %832 = vmatpush.msra.mxu0 0.0
    %833 = vmatpush.msra.mxu0 0.0
    %834 = vmatpush.msra.mxu0 0.0
    %835 = vmatpush.msra.mxu0 0.0
    %836 = vmatpush.msra.mxu0 0.0
    %837 = vmatpush.msra.mxu0 0.0
    %838 = vmatpush.msra.mxu0 0.0
    %v839 = vand.u32 %v793, 4294901760
    %v840 = vsub.f32 %v793, %v839
    %v841 = vand.u32 %v840, 4294901760
    %v842 = vsub.f32 %v840, %v841
    %v843 = vand.u32 %v842, 4294901760
    %844 = vmatpush.msra.mxu0 %v843
    %v845 = vand.u32 %v785, 4294901760
    %v846 = vsub.f32 %v785, %v845
    %v847 = vand.u32 %v846, 4294901760
    %v848 = vsub.f32 %v846, %v847
    %v849 = vand.u32 %v848, 4294901760
    %850 = vmatpush.msra.mxu0 %v849
    %v851 = vand.u32 %v777, 4294901760
    %v852 = vsub.f32 %v777, %v851
    %v853 = vand.u32 %v852, 4294901760
    %v854 = vsub.f32 %v852, %v853
    %v855 = vand.u32 %v854, 4294901760
    %856 = vmatpush.msra.mxu0 %v855
    %v857 = vand.u32 %v769, 4294901760
    %v858 = vsub.f32 %v769, %v857
    %v859 = vand.u32 %v858, 4294901760
    %v860 = vsub.f32 %v858, %v859
    %v861 = vand.u32 %v860, 4294901760
    %862 = vmatpush.msra.mxu0 %v861
    %v863 = vand.u32 %v728, 4294901760
    %v864 = vsub.f32 %v728, %v863
    %v865 = vand.u32 %v864, 4294901760
    %v866 = vsub.f32 %v864, %v865
    %v867 = vand.u32 %v866, 4294901760
    %868 = vmatpush.msra.mxu0 %v867
    %v869 = vand.u32 %v761, 4294901760
    %v870 = vsub.f32 %v761, %v869
    %v871 = vand.u32 %v870, 4294901760
    %v872 = vsub.f32 %v870, %v871
    %v873 = vand.u32 %v872, 4294901760
    %874 = vmatpush.msra.mxu0 %v873
    %v875 = vand.u32 %v753, 4294901760
    %v876 = vsub.f32 %v753, %v875
    %v877 = vand.u32 %v876, 4294901760
    %v878 = vsub.f32 %v876, %v877
    %v879 = vand.u32 %v878, 4294901760
    %880 = vmatpush.msra.mxu0 %v879
    %v881 = vand.u32 %v745, 4294901760
    %v882 = vsub.f32 %v745, %v881
    %v883 = vand.u32 %v882, 4294901760
    %v884 = vsub.f32 %v882, %v883
    %v885 = vand.u32 %v884, 4294901760
    %886 = vmatpush.msra.mxu0 %v885
    %v887 = vand.u32 %v737, 4294901760
    %v888 = vsub.f32 %v737, %v887
    %v889 = vand.u32 %v888, 4294901760
    %v890 = vsub.f32 %v888, %v889
    %v891 = vand.u32 %v890, 4294901760
    %892 = vmatpush.msra.mxu0 %v891
    %v893 = vand.u32 %v796, 4294901760
    %894 = vmatmul.f32.gmra.mxu0 %v893
    %v895 = vpop.f32.mrf.mxu0
    %v896 = vadd.f32 %v830, %v895
    %897 = vdwg.mxu0
    %898 = vmatpush.msra.mxu0 0.0
    %899 = vmatpush.msra.mxu0 0.0
    %900 = vmatpush.msra.mxu0 0.0
    %901 = vmatpush.msra.mxu0 0.0
    %902 = vmatpush.msra.mxu0 0.0
    %903 = vmatpush.msra.mxu0 0.0
    %904 = vmatpush.msra.mxu0 0.0
    %v905 = vand.u32 %v793, 4294901760
    %v906 = vsub.f32 %v793, %v905
    %907 = vmatpush.msra.mxu0 %v906
    %v908 = vand.u32 %v785, 4294901760
    %v909 = vsub.f32 %v785, %v908
    %910 = vmatpush.msra.mxu0 %v909
    %v911 = vand.u32 %v777, 4294901760
    %v912 = vsub.f32 %v777, %v911
    %913 = vmatpush.msra.mxu0 %v912
    %v914 = vand.u32 %v769, 4294901760
    %v915 = vsub.f32 %v769, %v914
    %916 = vmatpush.msra.mxu0 %v915
    %v917 = vand.u32 %v728, 4294901760
    %v918 = vsub.f32 %v728, %v917
    %919 = vmatpush.msra.mxu0 %v918
    %v920 = vand.u32 %v761, 4294901760
    %v921 = vsub.f32 %v761, %v920
    %922 = vmatpush.msra.mxu0 %v921
    %v923 = vand.u32 %v753, 4294901760
    %v924 = vsub.f32 %v753, %v923
    %925 = vmatpush.msra.mxu0 %v924
    %v926 = vand.u32 %v745, 4294901760
    %v927 = vsub.f32 %v745, %v926
    %928 = vmatpush.msra.mxu0 %v927
    %v929 = vand.u32 %v737, 4294901760
    %v930 = vsub.f32 %v737, %v929
    %931 = vmatpush.msra.mxu0 %v930
    %v932 = vand.u32 %v796, 4294901760
    %v933 = vsub.f32 %v796, %v932
    %934 = vmatmul.f32.gmra.mxu0 %v933
    %v935 = vpop.f32.mrf.mxu0
    %v936 = vadd.f32 %v896, %v935
    %937 = vdwg.mxu0
    %938 = vmatpush.msra.mxu0 0.0
    %939 = vmatpush.msra.mxu0 0.0
    %940 = vmatpush.msra.mxu0 0.0
    %941 = vmatpush.msra.mxu0 0.0
    %942 = vmatpush.msra.mxu0 0.0
    %943 = vmatpush.msra.mxu0 0.0
    %944 = vmatpush.msra.mxu0 0.0
    %v945 = vand.u32 %v793, 4294901760
    %946 = vmatpush.msra.mxu0 %v945
    %v947 = vand.u32 %v785, 4294901760
    %948 = vmatpush.msra.mxu0 %v947
    %v949 = vand.u32 %v777, 4294901760
    %950 = vmatpush.msra.mxu0 %v949
    %v951 = vand.u32 %v769, 4294901760
    %952 = vmatpush.msra.mxu0 %v951
    %v953 = vand.u32 %v728, 4294901760
    %954 = vmatpush.msra.mxu0 %v953
    %v955 = vand.u32 %v761, 4294901760
    %956 = vmatpush.msra.mxu0 %v955
    %v957 = vand.u32 %v753, 4294901760
    %958 = vmatpush.msra.mxu0 %v957
    %v959 = vand.u32 %v745, 4294901760
    %960 = vmatpush.msra.mxu0 %v959
    %v961 = vand.u32 %v737, 4294901760
    %962 = vmatpush.msra.mxu0 %v961
    %v963 = vand.u32 %v796, 4294901760
    %v964 = vsub.f32 %v796, %v963
    %v965 = vand.u32 %v964, 4294901760
    %966 = vmatmul.f32.gmra.mxu0 %v965
    %v967 = vpop.f32.mrf.mxu0
    %v968 = vadd.f32 %v936, %v967
    %969 = vdwg.mxu0
    %970 = vmatpush.msra.mxu0 0.0
    %971 = vmatpush.msra.mxu0 0.0
    %972 = vmatpush.msra.mxu0 0.0
    %973 = vmatpush.msra.mxu0 0.0
    %974 = vmatpush.msra.mxu0 0.0
    %975 = vmatpush.msra.mxu0 0.0
    %976 = vmatpush.msra.mxu0 0.0
    %v977 = vand.u32 %v793, 4294901760
    %v978 = vsub.f32 %v793, %v977
    %v979 = vand.u32 %v978, 4294901760
    %980 = vmatpush.msra.mxu0 %v979
    %v981 = vand.u32 %v785, 4294901760
    %v982 = vsub.f32 %v785, %v981
    %v983 = vand.u32 %v982, 4294901760
    %984 = vmatpush.msra.mxu0 %v983
    %v985 = vand.u32 %v777, 4294901760
    %v986 = vsub.f32 %v777, %v985
    %v987 = vand.u32 %v986, 4294901760
    %988 = vmatpush.msra.mxu0 %v987
    %v989 = vand.u32 %v769, 4294901760
    %v990 = vsub.f32 %v769, %v989
    %v991 = vand.u32 %v990, 4294901760
    %992 = vmatpush.msra.mxu0 %v991
    %v993 = vand.u32 %v728, 4294901760
    %v994 = vsub.f32 %v728, %v993
    %v995 = vand.u32 %v994, 4294901760
    %996 = vmatpush.msra.mxu0 %v995
    %v997 = vand.u32 %v761, 4294901760
    %v998 = vsub.f32 %v761, %v997
    %v999 = vand.u32 %v998, 4294901760
    %1000 = vmatpush.msra.mxu0 %v999
    %v1001 = vand.u32 %v753, 4294901760
    %v1002 = vsub.f32 %v753, %v1001
    %v1003 = vand.u32 %v1002, 4294901760
    %1004 = vmatpush.msra.mxu0 %v1003
    %v1005 = vand.u32 %v745, 4294901760
    %v1006 = vsub.f32 %v745, %v1005
    %v1007 = vand.u32 %v1006, 4294901760
    %1008 = vmatpush.msra.mxu0 %v1007
    %v1009 = vand.u32 %v737, 4294901760
    %v1010 = vsub.f32 %v737, %v1009
    %v1011 = vand.u32 %v1010, 4294901760
    %1012 = vmatpush.msra.mxu0 %v1011
    %v1013 = vand.u32 %v796, 4294901760
    %1014 = vmatmul.f32.gmra.mxu0 %v1013
    %v1015 = vpop.f32.mrf.mxu0
    %v1016 = vadd.f32 %v968, %v1015
    %1017 = vdwg.mxu0
    %1018 = vmatpush.msra.mxu0 0.0
    %1019 = vmatpush.msra.mxu0 0.0
    %1020 = vmatpush.msra.mxu0 0.0
    %1021 = vmatpush.msra.mxu0 0.0
    %1022 = vmatpush.msra.mxu0 0.0
    %1023 = vmatpush.msra.mxu0 0.0
    %1024 = vmatpush.msra.mxu0 0.0
    %v1025 = vand.u32 %v793, 4294901760
    %1026 = vmatpush.msra.mxu0 %v1025
    %v1027 = vand.u32 %v785, 4294901760
    %1028 = vmatpush.msra.mxu0 %v1027
    %v1029 = vand.u32 %v777, 4294901760
    %1030 = vmatpush.msra.mxu0 %v1029
    %v1031 = vand.u32 %v769, 4294901760
    %1032 = vmatpush.msra.mxu0 %v1031
    %v1033 = vand.u32 %v728, 4294901760
    %1034 = vmatpush.msra.mxu0 %v1033
    %v1035 = vand.u32 %v761, 4294901760
    %1036 = vmatpush.msra.mxu0 %v1035
    %v1037 = vand.u32 %v753, 4294901760
    %1038 = vmatpush.msra.mxu0 %v1037
    %v1039 = vand.u32 %v745, 4294901760
    %1040 = vmatpush.msra.mxu0 %v1039
    %v1041 = vand.u32 %v737, 4294901760
    %1042 = vmatpush.msra.mxu0 %v1041
    %v1043 = vand.u32 %v796, 4294901760
    %1044 = vmatmul.f32.gmra.mxu0 %v1043
    %v1045 = vpop.f32.mrf.mxu0
    %v1046 = vadd.f32 %v1016, %v1045
    %1047 = vdwg.mxu0
    %1048 = vmatpush.msra.mxu0 0.0
    %1049 = vmatpush.msra.mxu0 0.0
    %1050 = vmatpush.msra.mxu0 0.0
    %1051 = vmatpush.msra.mxu0 0.0
    %1052 = vmatpush.msra.mxu0 0.0
    %1053 = vmatpush.msra.mxu0 0.0
    %1054 = vmatpush.msra.mxu0 0.0
    %v1055 = vand.u32 %v794, 4294901760
    %1056 = vmatpush.msra.mxu0 %v1055
    %v1057 = vand.u32 %v786, 4294901760
    %1058 = vmatpush.msra.mxu0 %v1057
    %v1059 = vand.u32 %v778, 4294901760
    %1060 = vmatpush.msra.mxu0 %v1059
    %v1061 = vand.u32 %v770, 4294901760
    %1062 = vmatpush.msra.mxu0 %v1061
    %v1063 = vand.u32 %v729, 4294901760
    %1064 = vmatpush.msra.mxu0 %v1063
    %v1065 = vand.u32 %v762, 4294901760
    %1066 = vmatpush.msra.mxu0 %v1065
    %v1067 = vand.u32 %v754, 4294901760
    %1068 = vmatpush.msra.mxu0 %v1067
    %v1069 = vand.u32 %v746, 4294901760
    %1070 = vmatpush.msra.mxu0 %v1069
    %v1071 = vand.u32 %v738, 4294901760
    %1072 = vmatpush.msra.mxu0 %v1071
    %v1073 = vand.u32 %v796, 4294901760
    %v1074 = vsub.f32 %v796, %v1073
    %v1075 = vand.u32 %v1074, 4294901760
    %v1076 = vsub.f32 %v1074, %v1075
    %v1077 = vand.u32 %v1076, 4294901760
    %1078 = vmatmul.f32.gmra.mxu0 %v1077
    %v1079 = vpop.f32.mrf.mxu0
    %v1080 = vadd.f32 0.0, %v1079
    %1081 = vdwg.mxu0
    %1082 = vmatpush.msra.mxu0 0.0
    %1083 = vmatpush.msra.mxu0 0.0
    %1084 = vmatpush.msra.mxu0 0.0
    %1085 = vmatpush.msra.mxu0 0.0
    %1086 = vmatpush.msra.mxu0 0.0
    %1087 = vmatpush.msra.mxu0 0.0
    %1088 = vmatpush.msra.mxu0 0.0
    %v1089 = vand.u32 %v794, 4294901760
    %v1090 = vsub.f32 %v794, %v1089
    %v1091 = vand.u32 %v1090, 4294901760
    %v1092 = vsub.f32 %v1090, %v1091
    %v1093 = vand.u32 %v1092, 4294901760
    %1094 = vmatpush.msra.mxu0 %v1093
    %v1095 = vand.u32 %v786, 4294901760
    %v1096 = vsub.f32 %v786, %v1095
    %v1097 = vand.u32 %v1096, 4294901760
    %v1098 = vsub.f32 %v1096, %v1097
    %v1099 = vand.u32 %v1098, 4294901760
    %1100 = vmatpush.msra.mxu0 %v1099
    %v1101 = vand.u32 %v778, 4294901760
    %v1102 = vsub.f32 %v778, %v1101
    %v1103 = vand.u32 %v1102, 4294901760
    %v1104 = vsub.f32 %v1102, %v1103
    %v1105 = vand.u32 %v1104, 4294901760
    %1106 = vmatpush.msra.mxu0 %v1105
    %v1107 = vand.u32 %v770, 4294901760
    %v1108 = vsub.f32 %v770, %v1107
    %v1109 = vand.u32 %v1108, 4294901760
    %v1110 = vsub.f32 %v1108, %v1109
    %v1111 = vand.u32 %v1110, 4294901760
    %1112 = vmatpush.msra.mxu0 %v1111
    %v1113 = vand.u32 %v729, 4294901760
    %v1114 = vsub.f32 %v729, %v1113
    %v1115 = vand.u32 %v1114, 4294901760
    %v1116 = vsub.f32 %v1114, %v1115
    %v1117 = vand.u32 %v1116, 4294901760
    %1118 = vmatpush.msra.mxu0 %v1117
    %v1119 = vand.u32 %v762, 4294901760
    %v1120 = vsub.f32 %v762, %v1119
    %v1121 = vand.u32 %v1120, 4294901760
    %v1122 = vsub.f32 %v1120, %v1121
    %v1123 = vand.u32 %v1122, 4294901760
    %1124 = vmatpush.msra.mxu0 %v1123
    %v1125 = vand.u32 %v754, 4294901760
    %v1126 = vsub.f32 %v754, %v1125
    %v1127 = vand.u32 %v1126, 4294901760
    %v1128 = vsub.f32 %v1126, %v1127
    %v1129 = vand.u32 %v1128, 4294901760
    %1130 = vmatpush.msra.mxu0 %v1129
    %v1131 = vand.u32 %v746, 4294901760
    %v1132 = vsub.f32 %v746, %v1131
    %v1133 = vand.u32 %v1132, 4294901760
    %v1134 = vsub.f32 %v1132, %v1133
    %v1135 = vand.u32 %v1134, 4294901760
    %1136 = vmatpush.msra.mxu0 %v1135
    %v1137 = vand.u32 %v738, 4294901760
    %v1138 = vsub.f32 %v738, %v1137
    %v1139 = vand.u32 %v1138, 4294901760
    %v1140 = vsub.f32 %v1138, %v1139
    %v1141 = vand.u32 %v1140, 4294901760
    %1142 = vmatpush.msra.mxu0 %v1141
    %v1143 = vand.u32 %v796, 4294901760
    %1144 = vmatmul.f32.gmra.mxu0 %v1143
    %v1145 = vpop.f32.mrf.mxu0
    %v1146 = vadd.f32 %v1080, %v1145
    %1147 = vdwg.mxu0
    %1148 = vmatpush.msra.mxu0 0.0
    %1149 = vmatpush.msra.mxu0 0.0
    %1150 = vmatpush.msra.mxu0 0.0
    %1151 = vmatpush.msra.mxu0 0.0
    %1152 = vmatpush.msra.mxu0 0.0
    %1153 = vmatpush.msra.mxu0 0.0
    %1154 = vmatpush.msra.mxu0 0.0
    %v1155 = vand.u32 %v794, 4294901760
    %v1156 = vsub.f32 %v794, %v1155
    %1157 = vmatpush.msra.mxu0 %v1156
    %v1158 = vand.u32 %v786, 4294901760
    %v1159 = vsub.f32 %v786, %v1158
    %1160 = vmatpush.msra.mxu0 %v1159
    %v1161 = vand.u32 %v778, 4294901760
    %v1162 = vsub.f32 %v778, %v1161
    %1163 = vmatpush.msra.mxu0 %v1162
    %v1164 = vand.u32 %v770, 4294901760
    %v1165 = vsub.f32 %v770, %v1164
    %1166 = vmatpush.msra.mxu0 %v1165
    %v1167 = vand.u32 %v729, 4294901760
    %v1168 = vsub.f32 %v729, %v1167
    %1169 = vmatpush.msra.mxu0 %v1168
    %v1170 = vand.u32 %v762, 4294901760
    %v1171 = vsub.f32 %v762, %v1170
    %1172 = vmatpush.msra.mxu0 %v1171
    %v1173 = vand.u32 %v754, 4294901760
    %v1174 = vsub.f32 %v754, %v1173
    %1175 = vmatpush.msra.mxu0 %v1174
    %v1176 = vand.u32 %v746, 4294901760
    %v1177 = vsub.f32 %v746, %v1176
    %1178 = vmatpush.msra.mxu0 %v1177
    %v1179 = vand.u32 %v738, 4294901760
    %v1180 = vsub.f32 %v738, %v1179
    %1181 = vmatpush.msra.mxu0 %v1180
    %v1182 = vand.u32 %v796, 4294901760
    %v1183 = vsub.f32 %v796, %v1182
    %1184 = vmatmul.f32.gmra.mxu0 %v1183
    %v1185 = vpop.f32.mrf.mxu0
    %v1186 = vadd.f32 %v1146, %v1185
    %1187 = vdwg.mxu0
    %1188 = vmatpush.msra.mxu0 0.0
    %1189 = vmatpush.msra.mxu0 0.0
    %1190 = vmatpush.msra.mxu0 0.0
    %1191 = vmatpush.msra.mxu0 0.0
    %1192 = vmatpush.msra.mxu0 0.0
    %1193 = vmatpush.msra.mxu0 0.0
    %1194 = vmatpush.msra.mxu0 0.0
    %v1195 = vand.u32 %v794, 4294901760
    %1196 = vmatpush.msra.mxu0 %v1195
    %v1197 = vand.u32 %v786, 4294901760
    %1198 = vmatpush.msra.mxu0 %v1197
    %v1199 = vand.u32 %v778, 4294901760
    %1200 = vmatpush.msra.mxu0 %v1199
    %v1201 = vand.u32 %v770, 4294901760
    %1202 = vmatpush.msra.mxu0 %v1201
    %v1203 = vand.u32 %v729, 4294901760
    %1204 = vmatpush.msra.mxu0 %v1203
    %v1205 = vand.u32 %v762, 4294901760
    %1206 = vmatpush.msra.mxu0 %v1205
    %v1207 = vand.u32 %v754, 4294901760
    %1208 = vmatpush.msra.mxu0 %v1207
    %v1209 = vand.u32 %v746, 4294901760
    %1210 = vmatpush.msra.mxu0 %v1209
    %v1211 = vand.u32 %v738, 4294901760
    %1212 = vmatpush.msra.mxu0 %v1211
    %v1213 = vand.u32 %v796, 4294901760
    %v1214 = vsub.f32 %v796, %v1213
    %v1215 = vand.u32 %v1214, 4294901760
    %1216 = vmatmul.f32.gmra.mxu0 %v1215
    %v1217 = vpop.f32.mrf.mxu0
    %v1218 = vadd.f32 %v1186, %v1217
    %1219 = vdwg.mxu0
    %1220 = vmatpush.msra.mxu0 0.0
    %1221 = vmatpush.msra.mxu0 0.0
    %1222 = vmatpush.msra.mxu0 0.0
    %1223 = vmatpush.msra.mxu0 0.0
    %1224 = vmatpush.msra.mxu0 0.0
    %1225 = vmatpush.msra.mxu0 0.0
    %1226 = vmatpush.msra.mxu0 0.0
    %v1227 = vand.u32 %v794, 4294901760
    %v1228 = vsub.f32 %v794, %v1227
    %v1229 = vand.u32 %v1228, 4294901760
    %1230 = vmatpush.msra.mxu0 %v1229
    %v1231 = vand.u32 %v786, 4294901760
    %v1232 = vsub.f32 %v786, %v1231
    %v1233 = vand.u32 %v1232, 4294901760
    %1234 = vmatpush.msra.mxu0 %v1233
    %v1235 = vand.u32 %v778, 4294901760
    %v1236 = vsub.f32 %v778, %v1235
    %v1237 = vand.u32 %v1236, 4294901760
    %1238 = vmatpush.msra.mxu0 %v1237
    %v1239 = vand.u32 %v770, 4294901760
    %v1240 = vsub.f32 %v770, %v1239
    %v1241 = vand.u32 %v1240, 4294901760
    %1242 = vmatpush.msra.mxu0 %v1241
    %v1243 = vand.u32 %v729, 4294901760
    %v1244 = vsub.f32 %v729, %v1243
    %v1245 = vand.u32 %v1244, 4294901760
    %1246 = vmatpush.msra.mxu0 %v1245
    %v1247 = vand.u32 %v762, 4294901760
    %v1248 = vsub.f32 %v762, %v1247
    %v1249 = vand.u32 %v1248, 4294901760
    %1250 = vmatpush.msra.mxu0 %v1249
    %v1251 = vand.u32 %v754, 4294901760
    %v1252 = vsub.f32 %v754, %v1251
    %v1253 = vand.u32 %v1252, 4294901760
    %1254 = vmatpush.msra.mxu0 %v1253
    %v1255 = vand.u32 %v746, 4294901760
    %v1256 = vsub.f32 %v746, %v1255
    %v1257 = vand.u32 %v1256, 4294901760
    %1258 = vmatpush.msra.mxu0 %v1257
    %v1259 = vand.u32 %v738, 4294901760
    %v1260 = vsub.f32 %v738, %v1259
    %v1261 = vand.u32 %v1260, 4294901760
    %1262 = vmatpush.msra.mxu0 %v1261
    %v1263 = vand.u32 %v796, 4294901760
    %1264 = vmatmul.f32.gmra.mxu0 %v1263
    %v1265 = vpop.f32.mrf.mxu0
    %v1266 = vadd.f32 %v1218, %v1265
    %1267 = vdwg.mxu0
    %1268 = vmatpush.msra.mxu0 0.0
    %1269 = vmatpush.msra.mxu0 0.0
    %1270 = vmatpush.msra.mxu0 0.0
    %1271 = vmatpush.msra.mxu0 0.0
    %1272 = vmatpush.msra.mxu0 0.0
    %1273 = vmatpush.msra.mxu0 0.0
    %1274 = vmatpush.msra.mxu0 0.0
    %v1275 = vand.u32 %v794, 4294901760
    %1276 = vmatpush.msra.mxu0 %v1275
    %v1277 = vand.u32 %v786, 4294901760
    %1278 = vmatpush.msra.mxu0 %v1277
    %v1279 = vand.u32 %v778, 4294901760
    %1280 = vmatpush.msra.mxu0 %v1279
    %v1281 = vand.u32 %v770, 4294901760
    %1282 = vmatpush.msra.mxu0 %v1281
    %v1283 = vand.u32 %v729, 4294901760
    %1284 = vmatpush.msra.mxu0 %v1283
    %v1285 = vand.u32 %v762, 4294901760
    %1286 = vmatpush.msra.mxu0 %v1285
    %v1287 = vand.u32 %v754, 4294901760
    %1288 = vmatpush.msra.mxu0 %v1287
    %v1289 = vand.u32 %v746, 4294901760
    %1290 = vmatpush.msra.mxu0 %v1289
    %v1291 = vand.u32 %v738, 4294901760
    %1292 = vmatpush.msra.mxu0 %v1291
    %v1293 = vand.u32 %v796, 4294901760
    %1294 = vmatmul.f32.gmra.mxu0 %v1293
    %v1295 = vpop.f32.mrf.mxu0
    %v1296 = vadd.f32 %v1266, %v1295
    %1297 = vdwg.mxu0
    %v1298 = vadd.f32 %v1046, %v1296
    %1299 = vadd.xlane.f32.xlu0 %v1298
    %v1300 = vpop.xlane.xlu0 %1299
    %v1301 = vrot.slane %v1300, 4
    %v1302 = vadd.f32 %v1300, %v1301
    %v1303 = vmul.f32 %v1302, 0.001953125
    %1305 = vset.pattern.permute.xlu0 0
    %1306 = vperm.xlu0 %1305, %v1303
    %v1307 = vpop.permute.xlu0 %1306
    %v1309 = vsub.f32 %v1046, %v1307
    %v1310 = vsub.f32 %v1296, %v1307
    %v1311 = vmul.f32 %v1309, %v1309
    %v1312 = vmul.f32 %v1310, %v1310
    %v1313 = vadd.f32 %v1311, %v1312
    %1314 = vadd.xlane.f32.xlu0 %v1313
    %v1315 = vpop.xlane.xlu0 %1314
    %v1316 = vrot.slane %v1315, 4
    %v1317 = vadd.f32 %v1315, %v1316
    %v1318 = vmul.f32 %v1317, 0.001953125
    %v1319 = vadd.f32 %v1318, 1e-05
    %v1320 = vrsqrt.pop %v1319
    %v1321 = vmul.f32 %v1320, %v1319
    %v1322 = vmul.f32 %v1321, %v1320
    %v1323 = vmul.f32 0.5, %v1322
    %v1324 = vsub.f32 1.5, %v1323
    %v1325 = vmul.f32 %v1320, %v1324
    %vm1326 = vweird.f32 %v1319
    %vm1327 = vweird.f32 %v1320
    %vm1328 = vmor %vm1326, %vm1327
    %v1329 = vsel %vm1328, %v1320, %v1325
    %v1330 = vmul.f32 %v48, %v1329
    %1332 = vset.pattern.permute.xlu0 0
    %1333 = vperm.xlu0 %1332, %v1330
    %v1334 = vpop.permute.xlu0 %1333
    %v1336 = vmul.f32 %v1309, %v1334
    %v1337 = vmul.f32 %v1310, %v1334
    %v1338 = vadd.f32 %v1336, %v724
    %v1339 = vadd.f32 %v1337, %v724
    %v1340 = vadd.f32 %v1338, %v46
    %v1341 = vadd.f32 %v1339, %v47
    %v1342 = vmax.f32 %v1340, 0.0
    %v1343 = vmax.f32 %v1341, 0.0
    %1344 = vst [vmem:[#allocation7] sm:$0xff] %v1342
    %1345 = vst [vmem:[#allocation7 + $0x8] sm:$0xff] %v1343
    // Predicated region
    $region26: #{tpu_custom_call.1} parent=1 // pred_check
      _
    $region27: #{tpu_custom_call.1} parent=1 // pred_check_branch
      %1347 = sbr.rel (0) target = $region29
    $region28: #{tpu_custom_call.1} parent=1 // pred_region
      %1349 = vsyncadd [#allocation4], 0
      %s1351 = sshll.u32 [#allocation7], 4
      %s1352 = int_to_ptr.vmem [resolvable:$true] %s1351
      %s1353 = sshll.u32 %s4, 4
      %s1354 = int_to_ptr.hbm [resolvable:$true] %s1353
      %1356 = dma.vmem_to_hbm [thread:$0]  %s1352, 256, %s1354, [#allocation4]
    $region29: #{tpu_custom_call.1} parent=1 // pred_fallthru
      _
    // Predicated region
    $region30: #{tpu_custom_call.1} parent=1 // pred_check
      _
    $region31: #{tpu_custom_call.1} parent=1 // pred_check_branch
      %1358 = sbr.rel (0) target = $region33
    $region32: #{tpu_custom_call.1} parent=1 // pred_region
      %1360 = dma.done [#allocation4], 256
    $region33: #{tpu_custom_call.1} parent=1 // pred_fallthru
      _
    %1361 = vsyncpa [#allocation3], 1
    %1362 = vsyncpa [#allocation6], 1
    %1363 = vsyncpa [#allocation4], 1

</llo_original>
